<compile_context>
chip_gen: v7x
topology: tpu7x:2x2x1
jax: 0.10.0
libtpu: 0.0.40
codegen_flags: <defaults>
</compile_context>

<pallas_src>
import functools
import math

import jax
import jax.numpy as jnp
import numpy as np
from jax import lax
from jax.experimental import pallas as pl
from jax.experimental.pallas import tpu as pltpu

_TB = 8          # timesteps per scan block (one f32 sublane tile)
_BC_LANES = 128  # lane-aligned slab that holds the [B | C] columns of x_proj


def _silu(x):
    # x * sigmoid(x); approx reciprocal runs on the (otherwise idle) EUP slot.
    return x * pl.reciprocal(1.0 + jnp.exp(-x), approx=True)


def _softplus(x):
    return jnp.maximum(x, 0.0) + jnp.log(1.0 + jnp.exp(-jnp.abs(x)))


def _mamba_kernel(x_ref, w_in_ref, conv_w_ref, conv_b_ref, wx_ref, w_dt_ref,
                  b_dt_ref, a_log_ref, d_ref, w_out_ref, out_ref,
                  halo_scr, h_scr, delta_scr, dx_scr, bc_scr, y_scr,
                  *, tL, d_inner, dt_rank, d_state, d_conv):
    lc = pl.program_id(1)

    # ---- per-sequence init: zero SSM state and conv halo ----
    # NOTE: correct only because the L-chunk axis is the innermost, sequential
    # ("arbitrary") grid axis and batch is the outer ("parallel") axis.
    @pl.when(lc == 0)
    def _init():
        h_scr[...] = jnp.zeros_like(h_scr)
        halo_scr[...] = jnp.zeros_like(halo_scr)

    # ---- in_proj: bf16 x bf16 on the MXU, f32 accumulate ----
    x = x_ref[0]                                                 # (tL, d_model) bf16
    xz = jnp.dot(x, w_in_ref[...], preferred_element_type=jnp.float32)
    xs = xz[:, :d_inner]                                         # (tL, d_inner) f32
    z = xz[:, d_inner:]                                          # (tL, d_inner) f32

    # ---- depthwise causal conv1d, in registers ----
    # Tap k reads xs shifted by s = d_conv-1-k steps into the past; shifted
    # copies are built from value slices + a (d_conv-1)-row halo carried across
    # L-chunks (no full-chunk VMEM round trip, no misaligned full-tile reads).
    acc = conv_w_ref[d_conv - 1:d_conv, :] * xs + conv_b_ref[...]
    if d_conv > 1:
        halo = halo_scr[...]                                     # (d_conv-1, d_inner)
        for k in range(d_conv - 1):
            s = d_conv - 1 - k
            shifted = jnp.concatenate([halo[k:, :], xs[:tL - s, :]], axis=0)
            acc = acc + conv_w_ref[k:k + 1, :] * shifted
        halo_scr[...] = xs[tL - (d_conv - 1):, :]                # next chunk's halo
    xc = _silu(acc)                                              # (tL, d_inner) f32

    # ---- fused x_proj (one MXU pass), columns laid out [B | C | pad | dt] ----
    dbc = jnp.dot(xc.astype(jnp.bfloat16), wx_ref[...],
                  preferred_element_type=jnp.float32)            # (tL, pw)
    bc_scr[...] = dbc[:, :_BC_LANES]                             # lane-aligned B|C slab
    dt_lr = dbc[:, _BC_LANES:_BC_LANES + dt_rank]                # 128-aligned start

    # ---- dt_proj + softplus; stage delta and delta*x for the scan ----
    delta = _softplus(
        jnp.dot(dt_lr.astype(jnp.bfloat16), w_dt_ref[...],
                preferred_element_type=jnp.float32) + b_dt_ref[...])
    delta_scr[...] = delta
    dx_scr[...] = delta * xc

    # ---- selective scan with a stacked (d_state, d_inner) state ----
    #   h[t] = exp(delta[t]*A) * h[t-1] + (delta[t]*x[t]) * B[t]
    #   y[t] = sum_n C[t, n] * h[t, n, :]
    # All per-timestep updates are full (d_state, d_inner) VPU/EUP ops; B/C per
    # timestep come from one 1-vreg (8,128) transpose per 8-step block.
    A = -jnp.exp(a_log_ref[...])                                 # (d_state, d_inner)

    def blk_body(blk, h):
        base = pl.multiple_of(blk * _TB, _TB)
        d_blk = delta_scr[pl.ds(base, _TB), :]                   # (8, d_inner)
        dx_blk = dx_scr[pl.ds(base, _TB), :]                     # (8, d_inner)
        bcT = jnp.transpose(bc_scr[pl.ds(base, _TB), :])         # (128, 8) - 1 vreg
        b_t = bcT[:d_state, :]                                   # (d_state, 8): B[n,t]
        c_t = bcT[d_state:2 * d_state, :]                        # (d_state, 8): C[n,t]
        y_rows = []
        for t in range(_TB):                                     # static unroll
            dA = jnp.exp(d_blk[t:t + 1, :] * A)                  # (d_state, d_inner)
            h = dA * h + b_t[:, t:t + 1] * dx_blk[t:t + 1, :]    # full-width update
            y_rows.append(jnp.sum(c_t[:, t:t + 1] * h, axis=0, keepdims=True))
        # one aligned (8, d_inner) store instead of 8 masked row stores
        y_scr[pl.ds(base, _TB), :] = jnp.concatenate(y_rows, axis=0)
        return h

    h_fin = lax.fori_loop(0, tL // _TB, blk_body, h_scr[...])
    h_scr[...] = h_fin                                           # carry to next chunk

    # ---- D skip, silu gate, out_proj ----
    y = y_scr[...] + d_ref[...] * xc
    gated = (y * _silu(z)).astype(jnp.bfloat16)
    out_ref[0] = jnp.dot(gated, w_out_ref[...],
                         preferred_element_type=jnp.float32)     # (tL, d_model) f32


def _tpu_vmem_bytes():
    try:
        info = pltpu.get_tpu_info()
        cap = getattr(info, "vmem_capacity_bytes", None)
        if cap:
            return int(cap)
    except Exception:
        pass
    return 64 * 1024 * 1024   # conservative default (v7x per-TC VMEM)


def mamba_block_forward(x, p, *, d_inner, dt_rank, d_state, d_conv,
                        seq_tile=None):
    B, L, d_model = x.shape
    assert 2 * d_state <= _BC_LANES, "d_state too large for the B|C lane slab"
    assert d_conv >= 1

    # Fused, reordered, lane-padded x_proj weight: [B | C | 0.. | dt | 0..].
    pw_dt = ((dt_rank + 127) // 128) * 128
    pw = _BC_LANES + pw_dt
    wx_pad = (jnp.zeros((d_inner, pw), jnp.float32)
              .at[:, :2 * d_state].set(p["wx"][:, dt_rank:])
              .at[:, _BC_LANES:_BC_LANES + dt_rank].set(p["wx"][:, :dt_rank])
              .astype(jnp.bfloat16))
    w_in = p["w_in"].astype(jnp.bfloat16)
    w_dt = p["w_dt"].astype(jnp.bfloat16)
    w_out = p["w_out"].astype(jnp.bfloat16)

    # Generation-aware VMEM budget and L-chunk size.
    vmem_cap = _tpu_vmem_bytes()
    vmem_limit = min(int(vmem_cap * 0.85), 100 * 1024 * 1024)
    if seq_tile is None:
        weight_bytes = 2 * (w_in.size + wx_pad.size + w_dt.size + w_out.size)
        row_bytes = 4 * (3 * d_inner + _BC_LANES)       # f32 scratch rows
        row_bytes += 4 * (3 * d_inner + pw)             # live xz / xc / dbc values
        row_bytes += 2 * 2 * d_model + 2 * 4 * d_model  # x / out double buffers
        budget = max(vmem_limit - weight_bytes, 4 * 1024 * 1024) // 2
        seq_tile = 8
        for cand in (1024, 512, 256, 128, 64, 32, 16, 8):
            if L % cand == 0 and cand * row_bytes <= budget:
                seq_tile = cand
                break
    assert L % seq_tile == 0 and seq_tile % _TB == 0, (
        "L must split into sequence tiles that are a multiple of 8")
    num_chunks = L // seq_tile

    kernel = functools.partial(
        _mamba_kernel, tL=seq_tile, d_inner=d_inner, dt_rank=dt_rank,
        d_state=d_state, d_conv=d_conv)

    # Weights / parameters live whole-array in VMEM: one resident copy, no
    # per-grid-step pipelining and no double buffering.
    w_spec = pl.BlockSpec(memory_space=pltpu.MemorySpace.VMEM)

    in_specs = [
        pl.BlockSpec((1, seq_tile, d_model), lambda b, lc: (b, lc, 0)),
        w_spec, w_spec, w_spec, w_spec, w_spec, w_spec, w_spec, w_spec, w_spec,
    ]
    out_specs = pl.BlockSpec((1, seq_tile, d_model), lambda b, lc: (b, lc, 0))

    scratch_shapes = [
        pltpu.VMEM((max(d_conv - 1, 1), d_inner), jnp.float32),  # conv halo carry
        pltpu.VMEM((d_state, d_inner), jnp.float32),             # SSM state carry
        pltpu.VMEM((seq_tile, d_inner), jnp.float32),            # delta
        pltpu.VMEM((seq_tile, d_inner), jnp.float32),            # delta * xc
        pltpu.VMEM((seq_tile, _BC_LANES), jnp.float32),          # [B | C] slab
        pltpu.VMEM((seq_tile, d_inner), jnp.float32),            # y (scan output)
    ]

    return pl.pallas_call(
        kernel,
        out_shape=jax.ShapeDtypeStruct((B, L, d_model), jnp.float32),
        grid_spec=pltpu.PrefetchScalarGridSpec(
            num_scalar_prefetch=0,
            grid=(B, num_chunks),
            in_specs=in_specs,
            out_specs=out_specs,
            scratch_shapes=scratch_shapes),
        compiler_params=pltpu.CompilerParams(
            dimension_semantics=("parallel", "arbitrary"),
            vmem_limit_bytes=vmem_limit),
    )(x.astype(jnp.bfloat16), w_in, p["conv_w"], p["conv_b"], wx_pad, w_dt,
      p["b_dt"], p["a_log"], p["d"], w_out)


def init_params(key, d_model, *, expand_factor=2, d_state=2, d_conv=2,
                dt_min=0.01, dt_max=0.1, dt_scale=1.0, dt_init_floor=1e-4):
    """Deterministic synthetic init matching the PyTorch module's shapes."""
    d_inner = expand_factor * d_model
    dt_rank = math.ceil(d_model / 16)
    ks = jax.random.split(key, 8)

    def lin(k, fan_in, shape):
        bound = 1.0 / math.sqrt(fan_in)
        return jax.random.uniform(k, shape, jnp.float32, -bound, bound)

    w_in = lin(ks[0], d_model, (d_model, 2 * d_inner))          # in_proj.weight.T
    conv_w = lin(ks[1], d_conv, (d_conv, d_inner))              # conv1d.weight[c,0,k] -> [k,c]
    conv_b = lin(ks[2], d_conv, (1, d_inner))                   # conv1d.bias
    wx = lin(ks[3], d_inner, (d_inner, dt_rank + 2 * d_state))  # x_proj.weight.T ([dt|B|C])

    dt_init_std = dt_rank ** (-0.5) * dt_scale
    w_dt = jax.random.uniform(ks[4], (dt_rank, d_inner), jnp.float32,
                              -dt_init_std, dt_init_std)        # dt_proj.weight.T
    dt = jnp.exp(jax.random.uniform(ks[5], (d_inner,), jnp.float32)
                 * (math.log(dt_max) - math.log(dt_min)) + math.log(dt_min))
    dt = jnp.maximum(dt, dt_init_floor)
    inv_dt = dt + jnp.log(-jnp.expm1(-dt))                      # dt_proj.bias
    b_dt = inv_dt.reshape(1, d_inner)

    a_log = jnp.log(jnp.tile(
        jnp.arange(1, d_state + 1, dtype=jnp.float32)[:, None],
        (1, d_inner)))                                          # A_log, stored (d_state, d_inner)
    dparam = jnp.ones((1, d_inner), jnp.float32)                # D
    w_out = lin(ks[6], d_inner, (d_inner, d_model))             # out_proj.weight.T

    params = dict(w_in=w_in, conv_w=conv_w, conv_b=conv_b, wx=wx,
                  w_dt=w_dt, b_dt=b_dt, a_log=a_log, d=dparam, w_out=w_out)
    cfg = dict(d_inner=d_inner, dt_rank=dt_rank, d_state=d_state,
               d_conv=d_conv)
    return params, cfg


def mamba_ref(x, p, *, d_inner, dt_rank, d_state, d_conv):
    """Pure-JAX f32 reference mirroring the PyTorch forward."""
    Bsz, L, _ = x.shape
    xz = x @ p["w_in"]
    xs, z = xz[..., :d_inner], xz[..., d_inner:]
    xpad = jnp.pad(xs, ((0, 0), (d_conv - 1, 0), (0, 0)))
    conv = sum(p["conv_w"][k][None, None, :] * xpad[:, k:k + L, :]
               for k in range(d_conv)) + p["conv_b"][None]
    xc = conv * jax.nn.sigmoid(conv)
    dbc = xc @ p["wx"]
    dlt_lr = dbc[..., :dt_rank]
    Bm = dbc[..., dt_rank:dt_rank + d_state]
    Cm = dbc[..., dt_rank + d_state:dt_rank + 2 * d_state]
    delta = jax.nn.softplus(dlt_lr @ p["w_dt"] + p["b_dt"])
    A = -jnp.exp(p["a_log"])                                    # (d_state, d_inner)
    dA = jnp.exp(delta[:, :, None, :] * A)                      # (B,L,ds,di)
    BX = (delta * xc)[:, :, None, :] * Bm[..., :, None]

    def step(h, inp):
        dA_t, BX_t = inp
        h = dA_t * h + BX_t
        return h, h

    h0 = jnp.zeros((Bsz, d_state, d_inner), jnp.float32)
    _, hs = lax.scan(step, h0,
                     (jnp.swapaxes(dA, 0, 1), jnp.swapaxes(BX, 0, 1)))
    hs = jnp.swapaxes(hs, 0, 1)                                 # (B,L,ds,di)
    y = jnp.sum(hs * Cm[..., :, None], axis=2) + p["d"] * xc
    return (y * (z * jax.nn.sigmoid(z))) @ p["w_out"]


if __name__ == "__main__":
    key = jax.random.PRNGKey(0)
    kx, kp = jax.random.split(key)
    # d_model=128 keeps every matmul lane-dense -> d_inner=256, dt_rank=8,
    # d_state=2, d_conv=2.  seq_tile=16 exercises the L-chunked scan plus the
    # cross-chunk SSM-state / conv-halo carry (2 chunks per sequence).
    Bsz, L, d_model = 2, 32, 128
    x = jax.random.normal(kx, (Bsz, L, d_model), jnp.float32)
    params, cfg = init_params(kp, d_model)

    out = mamba_block_forward(x, params, seq_tile=16, **cfg)
    out = jax.block_until_ready(out)

    ref = mamba_ref(x, params, **cfg)
    np.testing.assert_allclose(np.asarray(out), np.asarray(ref),
                               rtol=2e-2, atol=2e-2)
    print("KERNEL_OK")
</pallas_src>

<mosaic_0001>
module attributes {stable_mosaic.version = 11 : i64} {
  func.func @_mamba_kernel(%arg0: i32, %arg1: i32, %arg2: memref<1x16x128xbf16, #tpu.memory_space<vmem>>, %arg3: memref<128x512xbf16, #tpu.memory_space<vmem>>, %arg4: memref<2x256xf32, #tpu.memory_space<vmem>>, %arg5: memref<1x256xf32, #tpu.memory_space<vmem>>, %arg6: memref<256x256xbf16, #tpu.memory_space<vmem>>, %arg7: memref<8x256xbf16, #tpu.memory_space<vmem>>, %arg8: memref<1x256xf32, #tpu.memory_space<vmem>>, %arg9: memref<2x256xf32, #tpu.memory_space<vmem>>, %arg10: memref<1x256xf32, #tpu.memory_space<vmem>>, %arg11: memref<256x128xbf16, #tpu.memory_space<vmem>>, %arg12: memref<1x16x128xf32, #tpu.memory_space<vmem>>, %arg13: memref<1x256xf32, #tpu.memory_space<vmem>>, %arg14: memref<2x256xf32, #tpu.memory_space<vmem>>, %arg15: memref<16x256xf32, #tpu.memory_space<vmem>>, %arg16: memref<16x256xf32, #tpu.memory_space<vmem>>, %arg17: memref<16x128xf32, #tpu.memory_space<vmem>>, %arg18: memref<16x256xf32, #tpu.memory_space<vmem>>) attributes {dimension_semantics = [#tpu.dimension_semantics<parallel>, #tpu.dimension_semantics<arbitrary>], iteration_bounds = array<i64: 2, 2>, scalar_prefetch = 0 : i64, scratch_operands = 6 : i64, tpu.core_type = #tpu.core_type<tc>, window_params = [{transform_indices = @transform_0, window_bounds = array<i64: 1, 16, 128>}, {pipeline_mode = #tpu.pipeline_mode<synchronous>, transform_indices = @transform_1, window_bounds = array<i64: 128, 512>}, {pipeline_mode = #tpu.pipeline_mode<synchronous>, transform_indices = @transform_2, window_bounds = array<i64: 2, 256>}, {pipeline_mode = #tpu.pipeline_mode<synchronous>, transform_indices = @transform_3, window_bounds = array<i64: 1, 256>}, {pipeline_mode = #tpu.pipeline_mode<synchronous>, transform_indices = @transform_4, window_bounds = array<i64: 256, 256>}, {pipeline_mode = #tpu.pipeline_mode<synchronous>, transform_indices = @transform_5, window_bounds = array<i64: 8, 256>}, {pipeline_mode = #tpu.pipeline_mode<synchronous>, transform_indices = @transform_6, window_bounds = array<i64: 1, 256>}, {pipeline_mode = #tpu.pipeline_mode<synchronous>, transform_indices = @transform_7, window_bounds = array<i64: 2, 256>}, {pipeline_mode = #tpu.pipeline_mode<synchronous>, transform_indices = @transform_8, window_bounds = array<i64: 1, 256>}, {pipeline_mode = #tpu.pipeline_mode<synchronous>, transform_indices = @transform_9, window_bounds = array<i64: 256, 128>}, {transform_indices = @transform_10, window_bounds = array<i64: 1, 16, 128>}]} {
    %c0_i32 = arith.constant 0 : i32
    %0 = arith.cmpi eq, %arg1, %c0_i32 : i32
    %1 = arith.extui %0 : i1 to i32
    %c0_i32_0 = arith.constant 0 : i32
    %2 = arith.cmpi ne, %1, %c0_i32_0 : i32
    scf.if %2 {
      %cst_54 = arith.constant 0.000000e+00 : f32
      %83 = vector.broadcast %cst_54 : f32 to vector<2x256xf32>
      %c0_55 = arith.constant 0 : index
      %c0_56 = arith.constant 0 : index
      %84 = vector.load %arg14[%c0_55, %c0_56] : memref<2x256xf32, #tpu.memory_space<vmem>>, vector<2x256xf32>
      tpu.vector_store %arg14[%c0_55, %c0_56], %83 {strides = array<i32>} : memref<2x256xf32, #tpu.memory_space<vmem>>, vector<2x256xf32>,
      %cst_57 = arith.constant 0.000000e+00 : f32
      %85 = vector.broadcast %cst_57 : f32 to vector<1x256xf32>
      %c0_58 = arith.constant 0 : index
      %c0_59 = arith.constant 0 : index
      %86 = vector.load %arg13[%c0_58, %c0_59] : memref<1x256xf32, #tpu.memory_space<vmem>>, vector<1x256xf32>
      tpu.vector_store %arg13[%c0_58, %c0_59], %85 {strides = array<i32>} : memref<1x256xf32, #tpu.memory_space<vmem>>, vector<1x256xf32>,
    } else {
    }
    %c0 = arith.constant 0 : index
    %c0_1 = arith.constant 0 : index
    %c0_2 = arith.constant 0 : index
    %3 = vector.load %arg2[%c0, %c0_1, %c0_2] : memref<1x16x128xbf16, #tpu.memory_space<vmem>>, vector<1x16x128xbf16>
    %4 = vector.shape_cast %3 : vector<1x16x128xbf16> to vector<16x128xbf16>
    %c0_3 = arith.constant 0 : index
    %c0_4 = arith.constant 0 : index
    %5 = vector.load %arg3[%c0_3, %c0_4] : memref<128x512xbf16, #tpu.memory_space<vmem>>, vector<128x512xbf16>
    %cst = arith.constant dense<0.000000e+00> : vector<16x512xf32>
    %6 = tpu.matmul %4, %5, %cst {dimension_numbers = #tpu.dot_dimension_numbers<[1], [0], [0], [1], [0, 0, 1, 1], [], []>} : vector<16x128xbf16>, vector<128x512xbf16>, vector<16x512xf32> -> vector<16x512xf32>
    %7 = vector.extract_strided_slice %6 {offsets = [0, 0], sizes = [16, 256], strides = [1, 1]} : vector<16x512xf32> to vector<16x256xf32>
    %8 = vector.extract_strided_slice %6 {offsets = [0, 256], sizes = [16, 256], strides = [1, 1]} : vector<16x512xf32> to vector<16x256xf32>
    %c1 = arith.constant 1 : index
    %c0_5 = arith.constant 0 : index
    %9 = vector.load %arg4[%c1, %c0_5] : memref<2x256xf32, #tpu.memory_space<vmem>>, vector<1x256xf32>
    %10 = vector.broadcast %9 : vector<1x256xf32> to vector<16x256xf32>
    %11 = arith.mulf %10, %7 : vector<16x256xf32>
    %c0_6 = arith.constant 0 : index
    %c0_7 = arith.constant 0 : index
    %12 = vector.load %arg5[%c0_6, %c0_7] : memref<1x256xf32, #tpu.memory_space<vmem>>, vector<1x256xf32>
    %13 = vector.broadcast %12 : vector<1x256xf32> to vector<16x256xf32>
    %14 = arith.addf %11, %13 : vector<16x256xf32>
    %c0_8 = arith.constant 0 : index
    %c0_9 = arith.constant 0 : index
    %15 = vector.load %arg13[%c0_8, %c0_9] : memref<1x256xf32, #tpu.memory_space<vmem>>, vector<1x256xf32>
    %16 = vector.extract_strided_slice %7 {offsets = [0, 0], sizes = [15, 256], strides = [1, 1]} : vector<16x256xf32> to vector<15x256xf32>
    %17 = tpu.concatenate %15, %16 in 0 : vector<1x256xf32>, vector<15x256xf32> -> vector<16x256xf32>
    %c0_10 = arith.constant 0 : index
    %c0_11 = arith.constant 0 : index
    %18 = vector.load %arg4[%c0_10, %c0_11] : memref<2x256xf32, #tpu.memory_space<vmem>>, vector<1x256xf32>
    %19 = vector.broadcast %18 : vector<1x256xf32> to vector<16x256xf32>
    %20 = arith.mulf %19, %17 : vector<16x256xf32>
    %21 = arith.addf %14, %20 : vector<16x256xf32>
    %22 = vector.extract_strided_slice %7 {offsets = [15, 0], sizes = [1, 256], strides = [1, 1]} : vector<16x256xf32> to vector<1x256xf32>
    %c0_12 = arith.constant 0 : index
    %c0_13 = arith.constant 0 : index
    %23 = vector.load %arg13[%c0_12, %c0_13] : memref<1x256xf32, #tpu.memory_space<vmem>>, vector<1x256xf32>
    tpu.vector_store %arg13[%c0_12, %c0_13], %22 {strides = array<i32>} : memref<1x256xf32, #tpu.memory_space<vmem>>, vector<1x256xf32>,
    %cst_14 = arith.constant 0.000000e+00 : f32
    %24 = vector.broadcast %cst_14 : f32 to vector<16x256xf32>
    %25 = arith.subf %24, %21 : vector<16x256xf32>
    %26 = math.exp %25 : vector<16x256xf32>
    %cst_15 = arith.constant 1.000000e+00 : f32
    %27 = vector.broadcast %cst_15 : f32 to vector<16x256xf32>
    %28 = arith.addf %27, %26 : vector<16x256xf32>
    %29 = tpu.reciprocal %28 {approx = true} : vector<16x256xf32> -> vector<16x256xf32>
    %30 = arith.mulf %21, %29 : vector<16x256xf32>
    %31 = arith.truncf %30 : vector<16x256xf32> to vector<16x256xbf16>
    %c0_16 = arith.constant 0 : index
    %c0_17 = arith.constant 0 : index
    %32 = vector.load %arg6[%c0_16, %c0_17] : memref<256x256xbf16, #tpu.memory_space<vmem>>, vector<256x256xbf16>
    %cst_18 = arith.constant dense<0.000000e+00> : vector<16x256xf32>
    %33 = tpu.matmul %31, %32, %cst_18 {dimension_numbers = #tpu.dot_dimension_numbers<[1], [0], [0], [1], [0, 0, 1, 1], [], []>} : vector<16x256xbf16>, vector<256x256xbf16>, vector<16x256xf32> -> vector<16x256xf32>
    %34 = vector.extract_strided_slice %33 {offsets = [0, 0], sizes = [16, 128], strides = [1, 1]} : vector<16x256xf32> to vector<16x128xf32>
    %c0_19 = arith.constant 0 : index
    %c0_20 = arith.constant 0 : index
    %35 = vector.load %arg17[%c0_19, %c0_20] : memref<16x128xf32, #tpu.memory_space<vmem>>, vector<16x128xf32>
    tpu.vector_store %arg17[%c0_19, %c0_20], %34 {strides = array<i32>} : memref<16x128xf32, #tpu.memory_space<vmem>>, vector<16x128xf32>,
    %36 = vector.extract_strided_slice %33 {offsets = [0, 128], sizes = [16, 8], strides = [1, 1]} : vector<16x256xf32> to vector<16x8xf32>
    %37 = arith.truncf %36 : vector<16x8xf32> to vector<16x8xbf16>
    %c0_21 = arith.constant 0 : index
    %c0_22 = arith.constant 0 : index
    %38 = vector.load %arg7[%c0_21, %c0_22] : memref<8x256xbf16, #tpu.memory_space<vmem>>, vector<8x256xbf16>
    %cst_23 = arith.constant dense<0.000000e+00> : vector<16x256xf32>
    %39 = tpu.matmul %37, %38, %cst_23 {dimension_numbers = #tpu.dot_dimension_numbers<[1], [0], [0], [1], [0, 0, 1, 1], [], []>} : vector<16x8xbf16>, vector<8x256xbf16>, vector<16x256xf32> -> vector<16x256xf32>
    %c0_24 = arith.constant 0 : index
    %c0_25 = arith.constant 0 : index
    %40 = vector.load %arg8[%c0_24, %c0_25] : memref<1x256xf32, #tpu.memory_space<vmem>>, vector<1x256xf32>
    %41 = vector.broadcast %40 : vector<1x256xf32> to vector<16x256xf32>
    %42 = arith.addf %39, %41 : vector<16x256xf32>
    %cst_26 = arith.constant 0.000000e+00 : f32
    %43 = vector.broadcast %cst_26 : f32 to vector<16x256xf32>
    %44 = arith.maximumf %42, %43 : vector<16x256xf32>
    %45 = math.absf %42 : vector<16x256xf32>
    %cst_27 = arith.constant 0.000000e+00 : f32
    %46 = vector.broadcast %cst_27 : f32 to vector<16x256xf32>
    %47 = arith.subf %46, %45 : vector<16x256xf32>
    %48 = math.exp %47 : vector<16x256xf32>
    %cst_28 = arith.constant 1.000000e+00 : f32
    %49 = vector.broadcast %cst_28 : f32 to vector<16x256xf32>
    %50 = arith.addf %49, %48 : vector<16x256xf32>
    %51 = math.log %50 : vector<16x256xf32>
    %52 = arith.addf %44, %51 : vector<16x256xf32>
    %c0_29 = arith.constant 0 : index
    %c0_30 = arith.constant 0 : index
    %53 = vector.load %arg15[%c0_29, %c0_30] : memref<16x256xf32, #tpu.memory_space<vmem>>, vector<16x256xf32>
    tpu.vector_store %arg15[%c0_29, %c0_30], %52 {strides = array<i32>} : memref<16x256xf32, #tpu.memory_space<vmem>>, vector<16x256xf32>,
    %54 = arith.mulf %52, %30 : vector<16x256xf32>
    %c0_31 = arith.constant 0 : index
    %c0_32 = arith.constant 0 : index
    %55 = vector.load %arg16[%c0_31, %c0_32] : memref<16x256xf32, #tpu.memory_space<vmem>>, vector<16x256xf32>
    tpu.vector_store %arg16[%c0_31, %c0_32], %54 {strides = array<i32>} : memref<16x256xf32, #tpu.memory_space<vmem>>, vector<16x256xf32>,
    %c0_33 = arith.constant 0 : index
    %c0_34 = arith.constant 0 : index
    %56 = vector.load %arg9[%c0_33, %c0_34] : memref<2x256xf32, #tpu.memory_space<vmem>>, vector<2x256xf32>
    %57 = math.exp %56 : vector<2x256xf32>
    %cst_35 = arith.constant 0.000000e+00 : f32
    %58 = vector.broadcast %cst_35 : f32 to vector<2x256xf32>
    %59 = arith.subf %58, %57 : vector<2x256xf32>
    %c0_36 = arith.constant 0 : index
    %c0_37 = arith.constant 0 : index
    %60 = vector.load %arg14[%c0_36, %c0_37] : memref<2x256xf32, #tpu.memory_space<vmem>>, vector<2x256xf32>
    %c0_i32_38 = arith.constant 0 : i32
    %c2_i32 = arith.constant 2 : i32
    %61 = arith.addi %c0_i32_38, %c2_i32 : i32
    %c1_i32 = arith.constant 1 : i32
    %62 = scf.for %arg19 = %c0_i32_38 to %61 step %c1_i32 iter_args(%arg20 = %60) -> (vector<2x256xf32>)  : i32 {
      %c8_i32 = arith.constant 8 : i32
      %83 = arith.muli %arg19, %c8_i32 : i32
      %84 = tpu.assume_multiple %83, 8 : i32
      %85 = arith.index_cast %84 : i32 to index
      %c0_54 = arith.constant 0 : index
      %86 = vector.load %arg15[%85, %c0_54] : memref<16x256xf32, #tpu.memory_space<vmem>>, vector<8x256xf32>
      %87 = arith.index_cast %84 : i32 to index
      %c0_55 = arith.constant 0 : index
      %88 = vector.load %arg16[%87, %c0_55] : memref<16x256xf32, #tpu.memory_space<vmem>>, vector<8x256xf32>
      %89 = arith.index_cast %84 : i32 to index
      %c0_56 = arith.constant 0 : index
      %90 = vector.load %arg17[%89, %c0_56] : memref<16x128xf32, #tpu.memory_space<vmem>>, vector<8x128xf32>
      %91 = tpu.transpose %90, [1, 0] : vector<8x128xf32> -> vector<128x8xf32>
      %92 = vector.extract_strided_slice %91 {offsets = [0, 0], sizes = [2, 8], strides = [1, 1]} : vector<128x8xf32> to vector<2x8xf32>
      %93 = vector.extract_strided_slice %91 {offsets = [2, 0], sizes = [2, 8], strides = [1, 1]} : vector<128x8xf32> to vector<2x8xf32>
      %94 = vector.extract_strided_slice %86 {offsets = [0, 0], sizes = [1, 256], strides = [1, 1]} : vector<8x256xf32> to vector<1x256xf32>
      %95 = vector.broadcast %94 : vector<1x256xf32> to vector<2x256xf32>
      %96 = arith.mulf %95, %59 : vector<2x256xf32>
      %97 = math.exp %96 : vector<2x256xf32>
      %98 = arith.mulf %97, %arg20 : vector<2x256xf32>
      %99 = vector.extract_strided_slice %92 {offsets = [0, 0], sizes = [2, 1], strides = [1, 1]} : vector<2x8xf32> to vector<2x1xf32>
      %100 = vector.extract_strided_slice %88 {offsets = [0, 0], sizes = [1, 256], strides = [1, 1]} : vector<8x256xf32> to vector<1x256xf32>
      %101 = vector.broadcast %99 : vector<2x1xf32> to vector<2x256xf32>
      %102 = vector.broadcast %100 : vector<1x256xf32> to vector<2x256xf32>
      %103 = arith.mulf %101, %102 : vector<2x256xf32>
      %104 = arith.addf %98, %103 : vector<2x256xf32>
      %105 = vector.extract_strided_slice %93 {offsets = [0, 0], sizes = [2, 1], strides = [1, 1]} : vector<2x8xf32> to vector<2x1xf32>
      %106 = vector.broadcast %105 : vector<2x1xf32> to vector<2x256xf32>
      %107 = arith.mulf %106, %104 : vector<2x256xf32>
      %cst_57 = arith.constant dense<0.000000e+00> : vector<256xf32>
      %108 = vector.multi_reduction <add>, %107, %cst_57 [0] : vector<2x256xf32> to vector<256xf32>
      %109 = vector.shape_cast %108 : vector<256xf32> to vector<1x256xf32>
      %110 = vector.extract_strided_slice %86 {offsets = [1, 0], sizes = [1, 256], strides = [1, 1]} : vector<8x256xf32> to vector<1x256xf32>
      %111 = vector.broadcast %110 : vector<1x256xf32> to vector<2x256xf32>
      %112 = arith.mulf %111, %59 : vector<2x256xf32>
      %113 = math.exp %112 : vector<2x256xf32>
      %114 = arith.mulf %113, %104 : vector<2x256xf32>
      %115 = vector.extract_strided_slice %92 {offsets = [0, 1], sizes = [2, 1], strides = [1, 1]} : vector<2x8xf32> to vector<2x1xf32>
      %116 = vector.extract_strided_slice %88 {offsets = [1, 0], sizes = [1, 256], strides = [1, 1]} : vector<8x256xf32> to vector<1x256xf32>
      %117 = vector.broadcast %115 : vector<2x1xf32> to vector<2x256xf32>
      %118 = vector.broadcast %116 : vector<1x256xf32> to vector<2x256xf32>
      %119 = arith.mulf %117, %118 : vector<2x256xf32>
      %120 = arith.addf %114, %119 : vector<2x256xf32>
      %121 = vector.extract_strided_slice %93 {offsets = [0, 1], sizes = [2, 1], strides = [1, 1]} : vector<2x8xf32> to vector<2x1xf32>
      %122 = vector.broadcast %121 : vector<2x1xf32> to vector<2x256xf32>
      %123 = arith.mulf %122, %120 : vector<2x256xf32>
      %cst_58 = arith.constant dense<0.000000e+00> : vector<256xf32>
      %124 = vector.multi_reduction <add>, %123, %cst_58 [0] : vector<2x256xf32> to vector<256xf32>
      %125 = vector.shape_cast %124 : vector<256xf32> to vector<1x256xf32>
      %126 = vector.extract_strided_slice %86 {offsets = [2, 0], sizes = [1, 256], strides = [1, 1]} : vector<8x256xf32> to vector<1x256xf32>
      %127 = vector.broadcast %126 : vector<1x256xf32> to vector<2x256xf32>
      %128 = arith.mulf %127, %59 : vector<2x256xf32>
      %129 = math.exp %128 : vector<2x256xf32>
      %130 = arith.mulf %129, %120 : vector<2x256xf32>
      %131 = vector.extract_strided_slice %92 {offsets = [0, 2], sizes = [2, 1], strides = [1, 1]} : vector<2x8xf32> to vector<2x1xf32>
      %132 = vector.extract_strided_slice %88 {offsets = [2, 0], sizes = [1, 256], strides = [1, 1]} : vector<8x256xf32> to vector<1x256xf32>
      %133 = vector.broadcast %131 : vector<2x1xf32> to vector<2x256xf32>
      %134 = vector.broadcast %132 : vector<1x256xf32> to vector<2x256xf32>
      %135 = arith.mulf %133, %134 : vector<2x256xf32>
      %136 = arith.addf %130, %135 : vector<2x256xf32>
      %137 = vector.extract_strided_slice %93 {offsets = [0, 2], sizes = [2, 1], strides = [1, 1]} : vector<2x8xf32> to vector<2x1xf32>
      %138 = vector.broadcast %137 : vector<2x1xf32> to vector<2x256xf32>
      %139 = arith.mulf %138, %136 : vector<2x256xf32>
      %cst_59 = arith.constant dense<0.000000e+00> : vector<256xf32>
      %140 = vector.multi_reduction <add>, %139, %cst_59 [0] : vector<2x256xf32> to vector<256xf32>
      %141 = vector.shape_cast %140 : vector<256xf32> to vector<1x256xf32>
      %142 = vector.extract_strided_slice %86 {offsets = [3, 0], sizes = [1, 256], strides = [1, 1]} : vector<8x256xf32> to vector<1x256xf32>
      %143 = vector.broadcast %142 : vector<1x256xf32> to vector<2x256xf32>
      %144 = arith.mulf %143, %59 : vector<2x256xf32>
      %145 = math.exp %144 : vector<2x256xf32>
      %146 = arith.mulf %145, %136 : vector<2x256xf32>
      %147 = vector.extract_strided_slice %92 {offsets = [0, 3], sizes = [2, 1], strides = [1, 1]} : vector<2x8xf32> to vector<2x1xf32>
      %148 = vector.extract_strided_slice %88 {offsets = [3, 0], sizes = [1, 256], strides = [1, 1]} : vector<8x256xf32> to vector<1x256xf32>
      %149 = vector.broadcast %147 : vector<2x1xf32> to vector<2x256xf32>
      %150 = vector.broadcast %148 : vector<1x256xf32> to vector<2x256xf32>
      %151 = arith.mulf %149, %150 : vector<2x256xf32>
      %152 = arith.addf %146, %151 : vector<2x256xf32>
      %153 = vector.extract_strided_slice %93 {offsets = [0, 3], sizes = [2, 1], strides = [1, 1]} : vector<2x8xf32> to vector<2x1xf32>
      %154 = vector.broadcast %153 : vector<2x1xf32> to vector<2x256xf32>
      %155 = arith.mulf %154, %152 : vector<2x256xf32>
      %cst_60 = arith.constant dense<0.000000e+00> : vector<256xf32>
      %156 = vector.multi_reduction <add>, %155, %cst_60 [0] : vector<2x256xf32> to vector<256xf32>
      %157 = vector.shape_cast %156 : vector<256xf32> to vector<1x256xf32>
      %158 = vector.extract_strided_slice %86 {offsets = [4, 0], sizes = [1, 256], strides = [1, 1]} : vector<8x256xf32> to vector<1x256xf32>
      %159 = vector.broadcast %158 : vector<1x256xf32> to vector<2x256xf32>
      %160 = arith.mulf %159, %59 : vector<2x256xf32>
      %161 = math.exp %160 : vector<2x256xf32>
      %162 = arith.mulf %161, %152 : vector<2x256xf32>
      %163 = vector.extract_strided_slice %92 {offsets = [0, 4], sizes = [2, 1], strides = [1, 1]} : vector<2x8xf32> to vector<2x1xf32>
      %164 = vector.extract_strided_slice %88 {offsets = [4, 0], sizes = [1, 256], strides = [1, 1]} : vector<8x256xf32> to vector<1x256xf32>
      %165 = vector.broadcast %163 : vector<2x1xf32> to vector<2x256xf32>
      %166 = vector.broadcast %164 : vector<1x256xf32> to vector<2x256xf32>
      %167 = arith.mulf %165, %166 : vector<2x256xf32>
      %168 = arith.addf %162, %167 : vector<2x256xf32>
      %169 = vector.extract_strided_slice %93 {offsets = [0, 4], sizes = [2, 1], strides = [1, 1]} : vector<2x8xf32> to vector<2x1xf32>
      %170 = vector.broadcast %169 : vector<2x1xf32> to vector<2x256xf32>
      %171 = arith.mulf %170, %168 : vector<2x256xf32>
      %cst_61 = arith.constant dense<0.000000e+00> : vector<256xf32>
      %172 = vector.multi_reduction <add>, %171, %cst_61 [0] : vector<2x256xf32> to vector<256xf32>
      %173 = vector.shape_cast %172 : vector<256xf32> to vector<1x256xf32>
      %174 = vector.extract_strided_slice %86 {offsets = [5, 0], sizes = [1, 256], strides = [1, 1]} : vector<8x256xf32> to vector<1x256xf32>
      %175 = vector.broadcast %174 : vector<1x256xf32> to vector<2x256xf32>
      %176 = arith.mulf %175, %59 : vector<2x256xf32>
      %177 = math.exp %176 : vector<2x256xf32>
      %178 = arith.mulf %177, %168 : vector<2x256xf32>
      %179 = vector.extract_strided_slice %92 {offsets = [0, 5], sizes = [2, 1], strides = [1, 1]} : vector<2x8xf32> to vector<2x1xf32>
      %180 = vector.extract_strided_slice %88 {offsets = [5, 0], sizes = [1, 256], strides = [1, 1]} : vector<8x256xf32> to vector<1x256xf32>
      %181 = vector.broadcast %179 : vector<2x1xf32> to vector<2x256xf32>
      %182 = vector.broadcast %180 : vector<1x256xf32> to vector<2x256xf32>
      %183 = arith.mulf %181, %182 : vector<2x256xf32>
      %184 = arith.addf %178, %183 : vector<2x256xf32>
      %185 = vector.extract_strided_slice %93 {offsets = [0, 5], sizes = [2, 1], strides = [1, 1]} : vector<2x8xf32> to vector<2x1xf32>
      %186 = vector.broadcast %185 : vector<2x1xf32> to vector<2x256xf32>
      %187 = arith.mulf %186, %184 : vector<2x256xf32>
      %cst_62 = arith.constant dense<0.000000e+00> : vector<256xf32>
      %188 = vector.multi_reduction <add>, %187, %cst_62 [0] : vector<2x256xf32> to vector<256xf32>
      %189 = vector.shape_cast %188 : vector<256xf32> to vector<1x256xf32>
      %190 = vector.extract_strided_slice %86 {offsets = [6, 0], sizes = [1, 256], strides = [1, 1]} : vector<8x256xf32> to vector<1x256xf32>
      %191 = vector.broadcast %190 : vector<1x256xf32> to vector<2x256xf32>
      %192 = arith.mulf %191, %59 : vector<2x256xf32>
      %193 = math.exp %192 : vector<2x256xf32>
      %194 = arith.mulf %193, %184 : vector<2x256xf32>
      %195 = vector.extract_strided_slice %92 {offsets = [0, 6], sizes = [2, 1], strides = [1, 1]} : vector<2x8xf32> to vector<2x1xf32>
      %196 = vector.extract_strided_slice %88 {offsets = [6, 0], sizes = [1, 256], strides = [1, 1]} : vector<8x256xf32> to vector<1x256xf32>
      %197 = vector.broadcast %195 : vector<2x1xf32> to vector<2x256xf32>
      %198 = vector.broadcast %196 : vector<1x256xf32> to vector<2x256xf32>
      %199 = arith.mulf %197, %198 : vector<2x256xf32>
      %200 = arith.addf %194, %199 : vector<2x256xf32>
      %201 = vector.extract_strided_slice %93 {offsets = [0, 6], sizes = [2, 1], strides = [1, 1]} : vector<2x8xf32> to vector<2x1xf32>
      %202 = vector.broadcast %201 : vector<2x1xf32> to vector<2x256xf32>
      %203 = arith.mulf %202, %200 : vector<2x256xf32>
      %cst_63 = arith.constant dense<0.000000e+00> : vector<256xf32>
      %204 = vector.multi_reduction <add>, %203, %cst_63 [0] : vector<2x256xf32> to vector<256xf32>
      %205 = vector.shape_cast %204 : vector<256xf32> to vector<1x256xf32>
      %206 = vector.extract_strided_slice %86 {offsets = [7, 0], sizes = [1, 256], strides = [1, 1]} : vector<8x256xf32> to vector<1x256xf32>
      %207 = vector.broadcast %206 : vector<1x256xf32> to vector<2x256xf32>
      %208 = arith.mulf %207, %59 : vector<2x256xf32>
      %209 = math.exp %208 : vector<2x256xf32>
      %210 = arith.mulf %209, %200 : vector<2x256xf32>
      %211 = vector.extract_strided_slice %92 {offsets = [0, 7], sizes = [2, 1], strides = [1, 1]} : vector<2x8xf32> to vector<2x1xf32>
      %212 = vector.extract_strided_slice %88 {offsets = [7, 0], sizes = [1, 256], strides = [1, 1]} : vector<8x256xf32> to vector<1x256xf32>
      %213 = vector.broadcast %211 : vector<2x1xf32> to vector<2x256xf32>
      %214 = vector.broadcast %212 : vector<1x256xf32> to vector<2x256xf32>
      %215 = arith.mulf %213, %214 : vector<2x256xf32>
      %216 = arith.addf %210, %215 : vector<2x256xf32>
      %217 = vector.extract_strided_slice %93 {offsets = [0, 7], sizes = [2, 1], strides = [1, 1]} : vector<2x8xf32> to vector<2x1xf32>
      %218 = vector.broadcast %217 : vector<2x1xf32> to vector<2x256xf32>
      %219 = arith.mulf %218, %216 : vector<2x256xf32>
      %cst_64 = arith.constant dense<0.000000e+00> : vector<256xf32>
      %220 = vector.multi_reduction <add>, %219, %cst_64 [0] : vector<2x256xf32> to vector<256xf32>
      %221 = vector.shape_cast %220 : vector<256xf32> to vector<1x256xf32>
      %222 = tpu.concatenate %109, %125, %141, %157, %173, %189, %205, %221 in 0 : vector<1x256xf32>, vector<1x256xf32>, vector<1x256xf32>, vector<1x256xf32>, vector<1x256xf32>, vector<1x256xf32>, vector<1x256xf32>, vector<1x256xf32> -> vector<8x256xf32>
      %223 = arith.index_cast %84 : i32 to index
      %c0_65 = arith.constant 0 : index
      %224 = vector.load %arg18[%223, %c0_65] : memref<16x256xf32, #tpu.memory_space<vmem>>, vector<8x256xf32>
      tpu.vector_store %arg18[%223, %c0_65], %222 {strides = array<i32>} : memref<16x256xf32, #tpu.memory_space<vmem>>, vector<8x256xf32>,
      scf.yield %216 : vector<2x256xf32>
    }
    %c2_i32_39 = arith.constant 2 : i32
    %c0_40 = arith.constant 0 : index
    %c0_41 = arith.constant 0 : index
    %63 = vector.load %arg14[%c0_40, %c0_41] : memref<2x256xf32, #tpu.memory_space<vmem>>, vector<2x256xf32>
    tpu.vector_store %arg14[%c0_40, %c0_41], %62 {strides = array<i32>} : memref<2x256xf32, #tpu.memory_space<vmem>>, vector<2x256xf32>,
    %c0_42 = arith.constant 0 : index
    %c0_43 = arith.constant 0 : index
    %64 = vector.load %arg18[%c0_42, %c0_43] : memref<16x256xf32, #tpu.memory_space<vmem>>, vector<16x256xf32>
    %c0_44 = arith.constant 0 : index
    %c0_45 = arith.constant 0 : index
    %65 = vector.load %arg10[%c0_44, %c0_45] : memref<1x256xf32, #tpu.memory_space<vmem>>, vector<1x256xf32>
    %66 = vector.broadcast %65 : vector<1x256xf32> to vector<16x256xf32>
    %67 = arith.mulf %66, %30 : vector<16x256xf32>
    %68 = arith.addf %64, %67 : vector<16x256xf32>
    %cst_46 = arith.constant 0.000000e+00 : f32
    %69 = vector.broadcast %cst_46 : f32 to vector<16x256xf32>
    %70 = arith.subf %69, %8 : vector<16x256xf32>
    %71 = math.exp %70 : vector<16x256xf32>
    %cst_47 = arith.constant 1.000000e+00 : f32
    %72 = vector.broadcast %cst_47 : f32 to vector<16x256xf32>
    %73 = arith.addf %72, %71 : vector<16x256xf32>
    %74 = tpu.reciprocal %73 {approx = true} : vector<16x256xf32> -> vector<16x256xf32>
    %75 = arith.mulf %8, %74 : vector<16x256xf32>
    %76 = arith.mulf %68, %75 : vector<16x256xf32>
    %77 = arith.truncf %76 : vector<16x256xf32> to vector<16x256xbf16>
    %c0_48 = arith.constant 0 : index
    %c0_49 = arith.constant 0 : index
    %78 = vector.load %arg11[%c0_48, %c0_49] : memref<256x128xbf16, #tpu.memory_space<vmem>>, vector<256x128xbf16>
    %cst_50 = arith.constant dense<0.000000e+00> : vector<16x128xf32>
    %79 = tpu.matmul %77, %78, %cst_50 {dimension_numbers = #tpu.dot_dimension_numbers<[1], [0], [0], [1], [0, 0, 1, 1], [], []>} : vector<16x256xbf16>, vector<256x128xbf16>, vector<16x128xf32> -> vector<16x128xf32>
    %c0_51 = arith.constant 0 : index
    %c0_52 = arith.constant 0 : index
    %c0_53 = arith.constant 0 : index
    %80 = vector.load %arg12[%c0_51, %c0_52, %c0_53] : memref<1x16x128xf32, #tpu.memory_space<vmem>>, vector<1x16x128xf32>
    %81 = vector.shape_cast %80 : vector<1x16x128xf32> to vector<16x128xf32>
    %82 = vector.shape_cast %79 : vector<16x128xf32> to vector<1x16x128xf32>
    tpu.vector_store %arg12[%c0_51, %c0_52, %c0_53], %82 {strides = array<i32>} : memref<1x16x128xf32, #tpu.memory_space<vmem>>, vector<1x16x128xf32>,
    return
  }
  func.func @transform_0(%arg0: i32, %arg1: i32) -> (i32, i32, i32) {
    %c0_i32 = arith.constant 0 : i32
    %c0_i32_0 = arith.constant 0 : i32
    return %arg0, %arg1, %c0_i32 : i32, i32, i32
  }
  func.func @transform_1(%arg0: i32, %arg1: i32) -> (i32, i32) {
    %c0_i32 = arith.constant 0 : i32
    %c0_i32_0 = arith.constant 0 : i32
    %c0_i32_1 = arith.constant 0 : i32
    return %c0_i32, %c0_i32_0 : i32, i32
  }
  func.func @transform_2(%arg0: i32, %arg1: i32) -> (i32, i32) {
    %c0_i32 = arith.constant 0 : i32
    %c0_i32_0 = arith.constant 0 : i32
    %c0_i32_1 = arith.constant 0 : i32
    return %c0_i32, %c0_i32_0 : i32, i32
  }
  func.func @transform_3(%arg0: i32, %arg1: i32) -> (i32, i32) {
    %c0_i32 = arith.constant 0 : i32
    %c0_i32_0 = arith.constant 0 : i32
    %c0_i32_1 = arith.constant 0 : i32
    return %c0_i32, %c0_i32_0 : i32, i32
  }
  func.func @transform_4(%arg0: i32, %arg1: i32) -> (i32, i32) {
    %c0_i32 = arith.constant 0 : i32
    %c0_i32_0 = arith.constant 0 : i32
    %c0_i32_1 = arith.constant 0 : i32
    return %c0_i32, %c0_i32_0 : i32, i32
  }
  func.func @transform_5(%arg0: i32, %arg1: i32) -> (i32, i32) {
    %c0_i32 = arith.constant 0 : i32
    %c0_i32_0 = arith.constant 0 : i32
    %c0_i32_1 = arith.constant 0 : i32
    return %c0_i32, %c0_i32_0 : i32, i32
  }
  func.func @transform_6(%arg0: i32, %arg1: i32) -> (i32, i32) {
    %c0_i32 = arith.constant 0 : i32
    %c0_i32_0 = arith.constant 0 : i32
    %c0_i32_1 = arith.constant 0 : i32
    return %c0_i32, %c0_i32_0 : i32, i32
  }
  func.func @transform_7(%arg0: i32, %arg1: i32) -> (i32, i32) {
    %c0_i32 = arith.constant 0 : i32
    %c0_i32_0 = arith.constant 0 : i32
    %c0_i32_1 = arith.constant 0 : i32
    return %c0_i32, %c0_i32_0 : i32, i32
  }
  func.func @transform_8(%arg0: i32, %arg1: i32) -> (i32, i32) {
    %c0_i32 = arith.constant 0 : i32
    %c0_i32_0 = arith.constant 0 : i32
    %c0_i32_1 = arith.constant 0 : i32
    return %c0_i32, %c0_i32_0 : i32, i32
  }
  func.func @transform_9(%arg0: i32, %arg1: i32) -> (i32, i32) {
    %c0_i32 = arith.constant 0 : i32
    %c0_i32_0 = arith.constant 0 : i32
    %c0_i32_1 = arith.constant 0 : i32
    return %c0_i32, %c0_i32_0 : i32, i32
  }
  func.func @transform_10(%arg0: i32, %arg1: i32) -> (i32, i32, i32) {
    %c0_i32 = arith.constant 0 : i32
    %c0_i32_0 = arith.constant 0 : i32
    return %arg0, %arg1, %c0_i32 : i32, i32, i32
  }
}

</mosaic_0001>

<llo_original>
// kernel: tpu_custom_call.1
$region0: #{tpu_custom_call.1}
  #allocation0 [shape = 'u32[]', space=smem, size = 0x4, offset = 0x4, fixed_abs, tag = 'smem constant byte address 0x4 - core index']
  #allocation1 [shape = 'u32[144,128]{1,0:T(1,128)}', space=vmem, size = 0x12000, scoped, tag = 'internal scratch']
  #allocation2 [shape = 'f32[1,256]{1,0:T(1,128)}', space=vmem, size = 0x400, scoped, tag = 'scratch operand']
  #allocation3 [shape = 'f32[2,256]{1,0:T(2,128)}', space=vmem, size = 0x800, scoped, tag = 'scratch operand']
  #allocation4 [shape = 'f32[16,256]{1,0:T(8,128)}', space=vmem, size = 0x4000, scoped, tag = 'scratch operand']
  #allocation5 [shape = 'f32[16,256]{1,0:T(8,128)}', space=vmem, size = 0x4000, scoped, tag = 'scratch operand']
  #allocation6 [shape = 'f32[16,128]{1,0:T(8,128)}', space=vmem, size = 0x2000, scoped, tag = 'scratch operand']
  #allocation7 [shape = 'f32[16,256]{1,0:T(8,128)}', space=vmem, size = 0x4000, scoped, tag = 'scratch operand']
  %s0 = inlined_call_operand.hbm [shape: bf16[2,32,128], index: 0, kind: input, shape index: {}]
  %s1 = inlined_call_operand.hbm [shape: bf16[128,512], index: 1, kind: input, shape index: {}]
  %s2 = inlined_call_operand.vmem [shape: f32[2,256], index: 2, kind: input, shape index: {}]
  %s3 = inlined_call_operand.vmem [shape: f32[1,256], index: 3, kind: input, shape index: {}]
  %s4 = inlined_call_operand.hbm [shape: bf16[256,256], index: 4, kind: input, shape index: {}]
  %s5 = inlined_call_operand.vmem [shape: bf16[8,256], index: 5, kind: input, shape index: {}]
  %s6 = inlined_call_operand.vmem [shape: f32[1,256], index: 6, kind: input, shape index: {}]
  %s7 = inlined_call_operand.vmem [shape: f32[2,256], index: 7, kind: input, shape index: {}]
  %s8 = inlined_call_operand.vmem [shape: f32[1,256], index: 8, kind: input, shape index: {}]
  %s9 = inlined_call_operand.hbm [shape: bf16[256,128], index: 9, kind: input, shape index: {}]
  %s10 = inlined_call_operand.hbm [shape: f32[2,32,128], index: 10, kind: output, shape index: {}]
  %s11 = sld [smem:[#allocation0]]
  $region100: #{tpu_custom_call.1} parent=0
    _
  %s13 = ssub.s32 1, %s11
  %s14 = scalar_select 0, %s13, %s11
  $region1: #{tpu_custom_call.1} parent=0
    #allocation8 [shape = 'u8[8192]{0}', space=vmem, size = 0x2000, scoped, tag = 'input window, operand 0']
    #allocation9 [shape = 's32[2]{0}', space=sflag, size = 0x8, scoped, tag = 'scoped memory for tpu_custom_call.1']
    #allocation10 [shape = 's32[2]{0}', space=sflag, size = 0x8, scoped, tag = 'scoped memory for tpu_custom_call.1']
    #allocation11 [shape = 'u8[131072]{0}', space=vmem, size = 0x20000, scoped, tag = 'input window, operand 1, single buffered']
    #allocation12 [shape = 's32[1]{0}', space=sflag, size = 0x4, scoped, tag = 'scoped memory for tpu_custom_call.1']
    #allocation13 [shape = 'u8[131072]{0}', space=vmem, size = 0x20000, scoped, tag = 'input window, operand 4, single buffered']
    #allocation14 [shape = 'u8[65536]{0}', space=vmem, size = 0x10000, scoped, tag = 'input window, operand 9, single buffered']
    #allocation15 [shape = 's32[1]{0}', space=sflag, size = 0x4, scoped, tag = 'scoped memory for tpu_custom_call.1']
    #allocation16 [shape = 'u8[16384]{0}', space=vmem, size = 0x4000, scoped, tag = 'output window, operand 0']
    %15 = vsyncpa [#allocation9], 0
    %s16 = scalar_lea.sflag [#allocation9], 1
    %17 = vsyncpa %s16, 0
    %18 = vsyncpa [#allocation12], 0
    %19 = vsyncpa [#allocation15], 0
    %20 = vsyncpa [#allocation10], 0
    %s21 = scalar_lea.sflag [#allocation10], 1
    %22 = vsyncpa %s21, 0
    loop: start=0, step=1, limit=6
    $region2: #{tpu_custom_call.1} parent=1 // loop_pre_header
      _
    $region3: #{tpu_custom_call.1} parent=1 // loop_header
      %s24 = sphi 0, %s28
      %p25 = scmp.ge.s32.totalorder %s24, 6
      %s31 = sphi 0, %s43
      %s32 = sphi 0, %s39
      %s33 = sphi 0, %s31
      %s34 = sphi 0, %s32
      %s35 = sphi 0, %s33
      %s36 = sphi 0, %s34
      %s48 = sphi 0, %s50
      %s51 = sphi 0, %s48
      %s52 = sphi 0, %s51
      %s68 = sphi 0, %s52
      %s72 = sphi 0, %s72
      %s74 = sphi 0, %s72
      %s75 = sphi 0, %s74
      %s89 = sphi 0, %s75
      %s93 = sphi 0, %s93
      %s95 = sphi 0, %s93
      %s96 = sphi 0, %s95
      %s110 = sphi 0, %s96
      %s114 = sphi 0, %s114
      %s116 = sphi 0, %s114
      %s117 = sphi 0, %s116
      %s131 = sphi 0, %s117
      %s135 = sphi 0, %s135
      %s137 = sphi 0, %s135
      %s138 = sphi 0, %s137
      %s152 = sphi 0, %s138
      %s156 = sphi 0, %s156
      %s158 = sphi 0, %s156
      %s159 = sphi 0, %s158
      %s173 = sphi 0, %s159
      %s177 = sphi 0, %s177
      %s179 = sphi 0, %s177
      %s180 = sphi 0, %s179
      %s194 = sphi 0, %s180
      %s198 = sphi 0, %s198
      %s200 = sphi 0, %s198
      %s201 = sphi 0, %s200
      %s215 = sphi 0, %s201
      %s219 = sphi 0, %s219
      %s221 = sphi 0, %s219
      %s222 = sphi 0, %s221
      %s236 = sphi 0, %s222
      %s240 = sphi 0, %s240
      %s242 = sphi 0, %s240
      %s243 = sphi 0, %s242
      %s257 = sphi 0, %s243
      %s265 = sphi 0, %s267
      %s268 = sphi 0, %s265
      %s269 = sphi 0, %s268
      %s285 = sphi 0, %s269
    $region4: #{tpu_custom_call.1} parent=1 // loop_header_branch
      %27 = sbr.rel (%p25) target = $region8
    $region5: #{tpu_custom_call.1} parent=1 // loop_body
      %s29 = ssub.s32 %s24, 1
      %s30 = ssub.s32 %s24, 2
      %s37 = sadd.s32 1, %s32
      %p38 = scmp.ge.s32.totalorder %s37, 2
      %s39 = scalar_select %p38, 0, %s37
      %s40 = sadd.s32 1, %s31
      %s41 = scalar_select %p38, %s40, %s31
      %p42 = scmp.ge.s32.totalorder %s41, 2
      %s43 = scalar_select %p42, 0, %s41
      %s44 = ssub.s32 %s31, %s43
      %s45 = ssub.s32 %s32, %s39
      %s46 = sor.u32 %s44, %s45
      %p47 = scmp.eq.s32.totalorder %s46, 0
      %s49 = sadd.s32 %s48, 1
      %s50 = scalar_select %p47, %s48, %s49
      %p53 = pneg %p47
      %p54 = scmp.eq.s32.totalorder %s24, 3
      %p55 = por %p53, %p54
      %p56 = scmp.ne.s32.totalorder %s48, %s51
      %p57 = scmp.eq.s32.totalorder %s24, 0
      %p58 = por %p56, %p57
      %p59 = scmp.ne.s32.totalorder %s48, %s51
      %p60 = scmp.eq.s32.totalorder %s29, 3
      %p61 = por %p59, %p60
      %p62 = scmp.ne.s32.totalorder %s51, %s52
      %p63 = scmp.eq.s32.totalorder %s29, 0
      %p64 = por %p62, %p63
      %p65 = scmp.ne.s32.totalorder %s51, %s52
      %p66 = scmp.eq.s32.totalorder %s30, 3
      %p67 = por %p65, %p66
      %p69 = scmp.ne.s32.totalorder %s52, %s68
      %p70 = scmp.eq.s32.totalorder %s30, 0
      %p71 = por %p69, %p70
      %s73 = sadd.s32 %s72, 1
      %p76 = scmp.eq.s32.totalorder %s24, 3
      %p77 = scmp.ne.s32.totalorder %s72, %s74
      %p78 = scmp.eq.s32.totalorder %s24, 0
      %p79 = por %p77, %p78
      %p80 = scmp.ne.s32.totalorder %s72, %s74
      %p81 = scmp.eq.s32.totalorder %s29, 3
      %p82 = por %p80, %p81
      %p83 = scmp.ne.s32.totalorder %s74, %s75
      %p84 = scmp.eq.s32.totalorder %s29, 0
      %p85 = por %p83, %p84
      %p86 = scmp.ne.s32.totalorder %s74, %s75
      %p87 = scmp.eq.s32.totalorder %s30, 3
      %p88 = por %p86, %p87
      %p90 = scmp.ne.s32.totalorder %s75, %s89
      %p91 = scmp.eq.s32.totalorder %s30, 0
      %p92 = por %p90, %p91
      %s94 = sadd.s32 %s93, 1
      %p97 = scmp.eq.s32.totalorder %s24, 3
      %p98 = scmp.ne.s32.totalorder %s93, %s95
      %p99 = scmp.eq.s32.totalorder %s24, 0
      %p100 = por %p98, %p99
      %p101 = scmp.ne.s32.totalorder %s93, %s95
      %p102 = scmp.eq.s32.totalorder %s29, 3
      %p103 = por %p101, %p102
      %p104 = scmp.ne.s32.totalorder %s95, %s96
      %p105 = scmp.eq.s32.totalorder %s29, 0
      %p106 = por %p104, %p105
      %p107 = scmp.ne.s32.totalorder %s95, %s96
      %p108 = scmp.eq.s32.totalorder %s30, 3
      %p109 = por %p107, %p108
      %p111 = scmp.ne.s32.totalorder %s96, %s110
      %p112 = scmp.eq.s32.totalorder %s30, 0
      %p113 = por %p111, %p112
      %s115 = sadd.s32 %s114, 1
      %p118 = scmp.eq.s32.totalorder %s24, 3
      %p119 = scmp.ne.s32.totalorder %s114, %s116
      %p120 = scmp.eq.s32.totalorder %s24, 0
      %p121 = por %p119, %p120
      %p122 = scmp.ne.s32.totalorder %s114, %s116
      %p123 = scmp.eq.s32.totalorder %s29, 3
      %p124 = por %p122, %p123
      %p125 = scmp.ne.s32.totalorder %s116, %s117
      %p126 = scmp.eq.s32.totalorder %s29, 0
      %p127 = por %p125, %p126
      %p128 = scmp.ne.s32.totalorder %s116, %s117
      %p129 = scmp.eq.s32.totalorder %s30, 3
      %p130 = por %p128, %p129
      %p132 = scmp.ne.s32.totalorder %s117, %s131
      %p133 = scmp.eq.s32.totalorder %s30, 0
      %p134 = por %p132, %p133
      %s136 = sadd.s32 %s135, 1
      %p139 = scmp.eq.s32.totalorder %s24, 3
      %p140 = scmp.ne.s32.totalorder %s135, %s137
      %p141 = scmp.eq.s32.totalorder %s24, 0
      %p142 = por %p140, %p141
      %p143 = scmp.ne.s32.totalorder %s135, %s137
      %p144 = scmp.eq.s32.totalorder %s29, 3
      %p145 = por %p143, %p144
      %p146 = scmp.ne.s32.totalorder %s137, %s138
      %p147 = scmp.eq.s32.totalorder %s29, 0
      %p148 = por %p146, %p147
      %p149 = scmp.ne.s32.totalorder %s137, %s138
      %p150 = scmp.eq.s32.totalorder %s30, 3
      %p151 = por %p149, %p150
      %p153 = scmp.ne.s32.totalorder %s138, %s152
      %p154 = scmp.eq.s32.totalorder %s30, 0
      %p155 = por %p153, %p154
      %s157 = sadd.s32 %s156, 1
      %p160 = scmp.eq.s32.totalorder %s24, 3
      %p161 = scmp.ne.s32.totalorder %s156, %s158
      %p162 = scmp.eq.s32.totalorder %s24, 0
      %p163 = por %p161, %p162
      %p164 = scmp.ne.s32.totalorder %s156, %s158
      %p165 = scmp.eq.s32.totalorder %s29, 3
      %p166 = por %p164, %p165
      %p167 = scmp.ne.s32.totalorder %s158, %s159
      %p168 = scmp.eq.s32.totalorder %s29, 0
      %p169 = por %p167, %p168
      %p170 = scmp.ne.s32.totalorder %s158, %s159
      %p171 = scmp.eq.s32.totalorder %s30, 3
      %p172 = por %p170, %p171
      %p174 = scmp.ne.s32.totalorder %s159, %s173
      %p175 = scmp.eq.s32.totalorder %s30, 0
      %p176 = por %p174, %p175
      %s178 = sadd.s32 %s177, 1
      %p181 = scmp.eq.s32.totalorder %s24, 3
      %p182 = scmp.ne.s32.totalorder %s177, %s179
      %p183 = scmp.eq.s32.totalorder %s24, 0
      %p184 = por %p182, %p183
      %p185 = scmp.ne.s32.totalorder %s177, %s179
      %p186 = scmp.eq.s32.totalorder %s29, 3
      %p187 = por %p185, %p186
      %p188 = scmp.ne.s32.totalorder %s179, %s180
      %p189 = scmp.eq.s32.totalorder %s29, 0
      %p190 = por %p188, %p189
      %p191 = scmp.ne.s32.totalorder %s179, %s180
      %p192 = scmp.eq.s32.totalorder %s30, 3
      %p193 = por %p191, %p192
      %p195 = scmp.ne.s32.totalorder %s180, %s194
      %p196 = scmp.eq.s32.totalorder %s30, 0
      %p197 = por %p195, %p196
      %s199 = sadd.s32 %s198, 1
      %p202 = scmp.eq.s32.totalorder %s24, 3
      %p203 = scmp.ne.s32.totalorder %s198, %s200
      %p204 = scmp.eq.s32.totalorder %s24, 0
      %p205 = por %p203, %p204
      %p206 = scmp.ne.s32.totalorder %s198, %s200
      %p207 = scmp.eq.s32.totalorder %s29, 3
      %p208 = por %p206, %p207
      %p209 = scmp.ne.s32.totalorder %s200, %s201
      %p210 = scmp.eq.s32.totalorder %s29, 0
      %p211 = por %p209, %p210
      %p212 = scmp.ne.s32.totalorder %s200, %s201
      %p213 = scmp.eq.s32.totalorder %s30, 3
      %p214 = por %p212, %p213
      %p216 = scmp.ne.s32.totalorder %s201, %s215
      %p217 = scmp.eq.s32.totalorder %s30, 0
      %p218 = por %p216, %p217
      %s220 = sadd.s32 %s219, 1
      %p223 = scmp.eq.s32.totalorder %s24, 3
      %p224 = scmp.ne.s32.totalorder %s219, %s221
      %p225 = scmp.eq.s32.totalorder %s24, 0
      %p226 = por %p224, %p225
      %p227 = scmp.ne.s32.totalorder %s219, %s221
      %p228 = scmp.eq.s32.totalorder %s29, 3
      %p229 = por %p227, %p228
      %p230 = scmp.ne.s32.totalorder %s221, %s222
      %p231 = scmp.eq.s32.totalorder %s29, 0
      %p232 = por %p230, %p231
      %p233 = scmp.ne.s32.totalorder %s221, %s222
      %p234 = scmp.eq.s32.totalorder %s30, 3
      %p235 = por %p233, %p234
      %p237 = scmp.ne.s32.totalorder %s222, %s236
      %p238 = scmp.eq.s32.totalorder %s30, 0
      %p239 = por %p237, %p238
      %s241 = sadd.s32 %s240, 1
      %p244 = scmp.eq.s32.totalorder %s24, 3
      %p245 = scmp.ne.s32.totalorder %s240, %s242
      %p246 = scmp.eq.s32.totalorder %s24, 0
      %p247 = por %p245, %p246
      %p248 = scmp.ne.s32.totalorder %s240, %s242
      %p249 = scmp.eq.s32.totalorder %s29, 3
      %p250 = por %p248, %p249
      %p251 = scmp.ne.s32.totalorder %s242, %s243
      %p252 = scmp.eq.s32.totalorder %s29, 0
      %p253 = por %p251, %p252
      %p254 = scmp.ne.s32.totalorder %s242, %s243
      %p255 = scmp.eq.s32.totalorder %s30, 3
      %p256 = por %p254, %p255
      %p258 = scmp.ne.s32.totalorder %s243, %s257
      %p259 = scmp.eq.s32.totalorder %s30, 0
      %p260 = por %p258, %p259
      %s261 = ssub.s32 %s31, %s43
      %s262 = ssub.s32 %s32, %s39
      %s263 = sor.u32 %s261, %s262
      %p264 = scmp.eq.s32.totalorder %s263, 0
      %s266 = sadd.s32 %s265, 1
      %s267 = scalar_select %p264, %s265, %s266
      %p270 = pneg %p264
      %p271 = scmp.eq.s32.totalorder %s24, 3
      %p272 = por %p270, %p271
      %p273 = scmp.ne.s32.totalorder %s265, %s268
      %p274 = scmp.eq.s32.totalorder %s24, 0
      %p275 = por %p273, %p274
      %p276 = scmp.ne.s32.totalorder %s265, %s268
      %p277 = scmp.eq.s32.totalorder %s29, 3
      %p278 = por %p276, %p277
      %p279 = scmp.ne.s32.totalorder %s268, %s269
      %p280 = scmp.eq.s32.totalorder %s29, 0
      %p281 = por %p279, %p280
      %p282 = scmp.ne.s32.totalorder %s268, %s269
      %p283 = scmp.eq.s32.totalorder %s30, 3
      %p284 = por %p282, %p283
      %p286 = scmp.ne.s32.totalorder %s269, %s285
      %p287 = scmp.eq.s32.totalorder %s30, 0
      %p288 = por %p286, %p287
      %p289 = scmp.le.s32.totalorder 1, %s24
      %p290 = scmp.lt.s32.totalorder %s24, 5
      %p291 = pnand %p289, %p290
      %p292 = pneg %p291
      // Predicated region
      $region9: #{tpu_custom_call.1} parent=5 // pred_check
        _
      $region10: #{tpu_custom_call.1} parent=5 // pred_check_branch
        %294 = sbr.rel (%p291) target = $region12
      $region11: #{tpu_custom_call.1} parent=5 // pred_region
        %s295 = ssub.s32 %s24, 1
        // Predicated region
        $region13: #{tpu_custom_call.1} parent=11 // pred_check
          %p296 = pneg %p85
        $region14: #{tpu_custom_call.1} parent=11 // pred_check_branch
          %298 = sbr.rel (%p296) target = $region16
        $region15: #{tpu_custom_call.1} parent=11 // pred_region
          %s300 = ssub.s32 4096, 4096
          %301 = vsyncadd [#allocation12], %s300
          %s302 = sshll.u32 [#allocation11], 4
          %s303 = int_to_ptr.vmem [resolvable:$true] %s302
          %308 = dma.hbm_to_vmem [thread:$0]  %s1, 4096, %s303, [#allocation12], 256, 256, 16
        $region16: #{tpu_custom_call.1} parent=11 // pred_fallthru
          _
        // Predicated region
        $region17: #{tpu_custom_call.1} parent=11 // pred_check
          %p309 = pneg %p106
        $region18: #{tpu_custom_call.1} parent=11 // pred_check_branch
          %311 = sbr.rel (%p309) target = $region20
        $region19: #{tpu_custom_call.1} parent=11 // pred_region
          _
        $region20: #{tpu_custom_call.1} parent=11 // pred_fallthru
          _
        // Predicated region
        $region21: #{tpu_custom_call.1} parent=11 // pred_check
          %p312 = pneg %p127
        $region22: #{tpu_custom_call.1} parent=11 // pred_check_branch
          %314 = sbr.rel (%p312) target = $region24
        $region23: #{tpu_custom_call.1} parent=11 // pred_region
          _
        $region24: #{tpu_custom_call.1} parent=11 // pred_fallthru
          _
        // Predicated region
        $region25: #{tpu_custom_call.1} parent=11 // pred_check
          %p315 = pneg %p148
        $region26: #{tpu_custom_call.1} parent=11 // pred_check_branch
          %317 = sbr.rel (%p315) target = $region28
        $region27: #{tpu_custom_call.1} parent=11 // pred_region
          %s319 = ssub.s32 4096, 4096
          %320 = vsyncadd [#allocation12], %s319
          %s321 = sshll.u32 [#allocation13], 4
          %s322 = int_to_ptr.vmem [resolvable:$true] %s321
          %327 = dma.hbm_to_vmem [thread:$0]  %s4, 4096, %s322, [#allocation12], 128, 128, 8
        $region28: #{tpu_custom_call.1} parent=11 // pred_fallthru
          _
        // Predicated region
        $region29: #{tpu_custom_call.1} parent=11 // pred_check
          %p328 = pneg %p169
        $region30: #{tpu_custom_call.1} parent=11 // pred_check_branch
          %330 = sbr.rel (%p328) target = $region32
        $region31: #{tpu_custom_call.1} parent=11 // pred_region
          _
        $region32: #{tpu_custom_call.1} parent=11 // pred_fallthru
          _
        // Predicated region
        $region33: #{tpu_custom_call.1} parent=11 // pred_check
          %p331 = pneg %p190
        $region34: #{tpu_custom_call.1} parent=11 // pred_check_branch
          %333 = sbr.rel (%p331) target = $region36
        $region35: #{tpu_custom_call.1} parent=11 // pred_region
          _
        $region36: #{tpu_custom_call.1} parent=11 // pred_fallthru
          _
        // Predicated region
        $region37: #{tpu_custom_call.1} parent=11 // pred_check
          %p334 = pneg %p211
        $region38: #{tpu_custom_call.1} parent=11 // pred_check_branch
          %336 = sbr.rel (%p334) target = $region40
        $region39: #{tpu_custom_call.1} parent=11 // pred_region
          _
        $region40: #{tpu_custom_call.1} parent=11 // pred_fallthru
          _
        // Predicated region
        $region41: #{tpu_custom_call.1} parent=11 // pred_check
          %p337 = pneg %p232
        $region42: #{tpu_custom_call.1} parent=11 // pred_check_branch
          %339 = sbr.rel (%p337) target = $region44
        $region43: #{tpu_custom_call.1} parent=11 // pred_region
          _
        $region44: #{tpu_custom_call.1} parent=11 // pred_fallthru
          _
        // Predicated region
        $region45: #{tpu_custom_call.1} parent=11 // pred_check
          %p340 = pneg %p253
        $region46: #{tpu_custom_call.1} parent=11 // pred_check_branch
          %342 = sbr.rel (%p340) target = $region48
        $region47: #{tpu_custom_call.1} parent=11 // pred_region
          %s344 = ssub.s32 2048, 2048
          %345 = vsyncadd [#allocation15], %s344
          %s346 = sshll.u32 [#allocation14], 4
          %s347 = int_to_ptr.vmem [resolvable:$true] %s346
          %352 = dma.hbm_to_vmem [thread:$0]  %s9, 2048, %s347, [#allocation15], 64, 64, 4
        $region48: #{tpu_custom_call.1} parent=11 // pred_fallthru
          _
      $region12: #{tpu_custom_call.1} parent=5 // pred_fallthru
        _
      %p353 = scmp.lt.s32.totalorder %s24, 4
      // Predicated region
      $region49: #{tpu_custom_call.1} parent=5 // pred_check
        %p354 = pneg %p353
      $region50: #{tpu_custom_call.1} parent=5 // pred_check_branch
        %356 = sbr.rel (%p354) target = $region52
      $region51: #{tpu_custom_call.1} parent=5 // pred_region
        // Predicated region
        $region53: #{tpu_custom_call.1} parent=51 // pred_check
          %p357 = pneg %p58
        $region54: #{tpu_custom_call.1} parent=51 // pred_check_branch
          %359 = sbr.rel (%p357) target = $region56
        $region55: #{tpu_custom_call.1} parent=51 // pred_region
          %s360 = sand.u32 %s48, 1
          %s361 = scalar_lea.sflag [#allocation9], %s360
          %s362 = sand.u32 %s48, 1
          %s363 = smul.addr %s362, 8
          %s364 = scalar_lea.vmem [#allocation8], %s363
          %s365 = smul.u32 2, %s32
          %s367 = ssub.s32 128, 128
          %368 = vsyncadd %s361, %s367
          %s369 = smul.addr %s31, 4
          %s370 = sadd.s32 %s365, %s369
          %s371 = smul.addr %s370, 64
          %s372 = scalar_lea.hbm %s0, %s371
          %s373 = sshll.u32 %s364, 4
          %s374 = int_to_ptr.vmem [resolvable:$true] %s373
          %379 = dma.hbm_to_vmem [thread:$0]  %s372, 128, %s374, %s361, 64, 64, 4
        $region56: #{tpu_custom_call.1} parent=51 // pred_fallthru
          _
      $region52: #{tpu_custom_call.1} parent=5 // pred_fallthru
        _
      %p380 = scmp.le.s32.totalorder 1, %s24
      %p381 = scmp.lt.s32.totalorder %s24, 5
      %p382 = pnand %p380, %p381
      %p383 = pneg %p382
      // Predicated region
      $region57: #{tpu_custom_call.1} parent=5 // pred_check
        _
      $region58: #{tpu_custom_call.1} parent=5 // pred_check_branch
        %385 = sbr.rel (%p382) target = $region60
      $region59: #{tpu_custom_call.1} parent=5 // pred_region
        %s386 = ssub.s32 %s24, 1
        %s387 = sand.u32 %s51, 1
        %s388 = scalar_lea.sflag [#allocation9], %s387
        %s389 = sand.u32 %s51, 1
        %s390 = smul.addr %s389, 8
        %s391 = scalar_lea.vmem [#allocation8], %s390
        // Predicated region
        $region61: #{tpu_custom_call.1} parent=59 // pred_check
          %p392 = pneg %p64
        $region62: #{tpu_custom_call.1} parent=59 // pred_check_branch
          %394 = sbr.rel (%p392) target = $region64
        $region63: #{tpu_custom_call.1} parent=59 // pred_region
          %395 = dma.done %s388, 128
        $region64: #{tpu_custom_call.1} parent=59 // pred_fallthru
          _
        // Predicated region
        $region65: #{tpu_custom_call.1} parent=59 // pred_check
          %p396 = pneg %p85
        $region66: #{tpu_custom_call.1} parent=59 // pred_check_branch
          %398 = sbr.rel (%p396) target = $region68
        $region67: #{tpu_custom_call.1} parent=59 // pred_region
          %399 = dma.done [#allocation12], 4096
        $region68: #{tpu_custom_call.1} parent=59 // pred_fallthru
          _
        // Predicated region
        $region69: #{tpu_custom_call.1} parent=59 // pred_check
          %p400 = pneg %p148
        $region70: #{tpu_custom_call.1} parent=59 // pred_check_branch
          %402 = sbr.rel (%p400) target = $region72
        $region71: #{tpu_custom_call.1} parent=59 // pred_region
          %403 = dma.done [#allocation12], 4096
        $region72: #{tpu_custom_call.1} parent=59 // pred_fallthru
          _
        // Predicated region
        $region73: #{tpu_custom_call.1} parent=59 // pred_check
          %p404 = pneg %p253
        $region74: #{tpu_custom_call.1} parent=59 // pred_check_branch
          %406 = sbr.rel (%p404) target = $region76
        $region75: #{tpu_custom_call.1} parent=59 // pred_region
          %407 = dma.done [#allocation15], 2048
        $region76: #{tpu_custom_call.1} parent=59 // pred_fallthru
          _
        %s408 = sand.u32 %s51, 1
        %s409 = scalar_lea.sflag [#allocation9], %s408
        %s410 = sand.u32 %s51, 1
        %s411 = smul.addr %s410, 8
        %s412 = scalar_lea.vmem [#allocation8], %s411
        %p413 = pneg %p64
        %p414 = pneg %p61
        %p415 = pneg %p85
        %p416 = pneg %p82
        %p417 = pneg %p106
        %p418 = pneg %p103
        %p419 = pneg %p127
        %p420 = pneg %p124
        %p421 = pneg %p148
        %p422 = pneg %p145
        %p423 = pneg %p169
        %p424 = pneg %p166
        %p425 = pneg %p190
        %p426 = pneg %p187
        %p427 = pneg %p211
        %p428 = pneg %p208
        %p429 = pneg %p232
        %p430 = pneg %p229
        %p431 = pneg %p253
        %p432 = pneg %p250
        %p433 = pneg %p281
        %p434 = pneg %p278
        %s435 = sand.u32 %s268, 1
        %s436 = scalar_lea.sflag [#allocation10], %s435
        %s437 = sand.u32 %s268, 1
        %s438 = smul.addr %s437, 16
        %s439 = scalar_lea.vmem [#allocation16], %s438
        %s440 = smul.u32 2, %s34
        %s441 = smul.u32 2, %s34
        %p443 = scmp.eq.s32.totalorder %s34, 0
        // Predicated region
        $region77: #{tpu_custom_call.1} parent=59 // pred_check
          %p444 = pneg %p443
        $region78: #{tpu_custom_call.1} parent=59 // pred_check_branch
          %446 = sbr.rel (%p444) target = $region80
        $region79: #{tpu_custom_call.1} parent=59 // pred_region
          %447 = vst [vmem:[#allocation3] sm:$0xf] 0.0
          %v448 = vlaneseq
          %vm449 = vcmp.ge.s32.totalorder %v448, 0
          %vm450 = vcmp.lt.s32.totalorder %v448, 256
          %vm451 = vmand %vm449, %vm450
          %452 = vst.msk [vmem:[#allocation2] sm:$0x3] %vm451, 0.0
        $region80: #{tpu_custom_call.1} parent=59 // pred_fallthru
          _
        %v453 = vld [vmem:[%s391] sm:$0xf]
        %v454 = vld [vmem:[%s391 + $0x4] sm:$0xf]
        %v455 = vld [vmem:[#allocation11] sm:$0xff]
        %v456 = vld [vmem:[#allocation11 + $0x8] sm:$0xff]
        %v457 = vld [vmem:[#allocation11 + $0x10] sm:$0xff]
        %v458 = vld [vmem:[#allocation11 + $0x18] sm:$0xff]
        %v459 = vld [vmem:[#allocation11 + $0x20] sm:$0xff]
        %v460 = vld [vmem:[#allocation11 + $0x28] sm:$0xff]
        %v461 = vld [vmem:[#allocation11 + $0x30] sm:$0xff]
        %v462 = vld [vmem:[#allocation11 + $0x38] sm:$0xff]
        %v463 = vld [vmem:[#allocation11 + $0x40] sm:$0xff]
        %v464 = vld [vmem:[#allocation11 + $0x48] sm:$0xff]
        %v465 = vld [vmem:[#allocation11 + $0x50] sm:$0xff]
        %v466 = vld [vmem:[#allocation11 + $0x58] sm:$0xff]
        %v467 = vld [vmem:[#allocation11 + $0x60] sm:$0xff]
        %v468 = vld [vmem:[#allocation11 + $0x68] sm:$0xff]
        %v469 = vld [vmem:[#allocation11 + $0x70] sm:$0xff]
        %v470 = vld [vmem:[#allocation11 + $0x78] sm:$0xff]
        %v471 = vld [vmem:[#allocation11 + $0x80] sm:$0xff]
        %v472 = vld [vmem:[#allocation11 + $0x88] sm:$0xff]
        %v473 = vld [vmem:[#allocation11 + $0x90] sm:$0xff]
        %v474 = vld [vmem:[#allocation11 + $0x98] sm:$0xff]
        %v475 = vld [vmem:[#allocation11 + $0xa0] sm:$0xff]
        %v476 = vld [vmem:[#allocation11 + $0xa8] sm:$0xff]
        %v477 = vld [vmem:[#allocation11 + $0xb0] sm:$0xff]
        %v478 = vld [vmem:[#allocation11 + $0xb8] sm:$0xff]
        %v479 = vld [vmem:[#allocation11 + $0xc0] sm:$0xff]
        %v480 = vld [vmem:[#allocation11 + $0xc8] sm:$0xff]
        %v481 = vld [vmem:[#allocation11 + $0xd0] sm:$0xff]
        %v482 = vld [vmem:[#allocation11 + $0xd8] sm:$0xff]
        %v483 = vld [vmem:[#allocation11 + $0xe0] sm:$0xff]
        %v484 = vld [vmem:[#allocation11 + $0xe8] sm:$0xff]
        %v485 = vld [vmem:[#allocation11 + $0xf0] sm:$0xff]
        %v486 = vld [vmem:[#allocation11 + $0xf8] sm:$0xff]
        %v489 = vunpack.c.l.b16 %v453
        %v490 = vunpack.c.l.b16 %v454
        %v491 = vpack.c.b16 %v490, %v489
        %v525 = vunpack.c.l.b16 %v455
        %v526 = vunpack.c.h.b16 %v455
        %v527 = vunpack.c.l.b16 %v456
        %v528 = vunpack.c.h.b16 %v456
        %v529 = vunpack.c.l.b16 %v457
        %v530 = vunpack.c.h.b16 %v457
        %v531 = vunpack.c.l.b16 %v458
        %v532 = vunpack.c.h.b16 %v458
        %v533 = vunpack.c.l.b16 %v459
        %v534 = vunpack.c.h.b16 %v459
        %v535 = vunpack.c.l.b16 %v460
        %v536 = vunpack.c.h.b16 %v460
        %v537 = vunpack.c.l.b16 %v461
        %v538 = vunpack.c.h.b16 %v461
        %v539 = vunpack.c.l.b16 %v462
        %v540 = vunpack.c.h.b16 %v462
        %v541 = vunpack.c.l.b16 %v463
        %v542 = vunpack.c.h.b16 %v463
        %v543 = vunpack.c.l.b16 %v464
        %v544 = vunpack.c.h.b16 %v464
        %v545 = vunpack.c.l.b16 %v465
        %v546 = vunpack.c.h.b16 %v465
        %v547 = vunpack.c.l.b16 %v466
        %v548 = vunpack.c.h.b16 %v466
        %v549 = vunpack.c.l.b16 %v467
        %v550 = vunpack.c.h.b16 %v467
        %v551 = vunpack.c.l.b16 %v468
        %v552 = vunpack.c.h.b16 %v468
        %v553 = vunpack.c.l.b16 %v469
        %v554 = vunpack.c.h.b16 %v469
        %v555 = vunpack.c.l.b16 %v470
        %v556 = vunpack.c.h.b16 %v470
        %v557 = vunpack.c.l.b16 %v471
        %v558 = vunpack.c.h.b16 %v471
        %v559 = vunpack.c.l.b16 %v472
        %v560 = vunpack.c.h.b16 %v472
        %v561 = vunpack.c.l.b16 %v473
        %v562 = vunpack.c.h.b16 %v473
        %v563 = vunpack.c.l.b16 %v474
        %v564 = vunpack.c.h.b16 %v474
        %v565 = vunpack.c.l.b16 %v475
        %v566 = vunpack.c.h.b16 %v475
        %v567 = vunpack.c.l.b16 %v476
        %v568 = vunpack.c.h.b16 %v476
        %v569 = vunpack.c.l.b16 %v477
        %v570 = vunpack.c.h.b16 %v477
        %v571 = vunpack.c.l.b16 %v478
        %v572 = vunpack.c.h.b16 %v478
        %v573 = vunpack.c.l.b16 %v479
        %v574 = vunpack.c.h.b16 %v479
        %v575 = vunpack.c.l.b16 %v480
        %v576 = vunpack.c.h.b16 %v480
        %v577 = vunpack.c.l.b16 %v481
        %v578 = vunpack.c.h.b16 %v481
        %v579 = vunpack.c.l.b16 %v482
        %v580 = vunpack.c.h.b16 %v482
        %v581 = vunpack.c.l.b16 %v483
        %v582 = vunpack.c.h.b16 %v483
        %v583 = vunpack.c.l.b16 %v484
        %v584 = vunpack.c.h.b16 %v484
        %v585 = vunpack.c.l.b16 %v485
        %v586 = vunpack.c.h.b16 %v485
        %v587 = vunpack.c.l.b16 %v486
        %v588 = vunpack.c.h.b16 %v486
        %v589 = vpack.c.b16 %v529, %v525
        %v590 = vpack.c.b16 %v530, %v526
        %v591 = vpack.c.b16 %v531, %v527
        %v592 = vpack.c.b16 %v532, %v528
        %v593 = vpack.c.b16 %v537, %v533
        %v594 = vpack.c.b16 %v538, %v534
        %v595 = vpack.c.b16 %v539, %v535
        %v596 = vpack.c.b16 %v540, %v536
        %v597 = vpack.c.b16 %v545, %v541
        %v598 = vpack.c.b16 %v546, %v542
        %v599 = vpack.c.b16 %v547, %v543
        %v600 = vpack.c.b16 %v548, %v544
        %v601 = vpack.c.b16 %v553, %v549
        %v602 = vpack.c.b16 %v554, %v550
        %v603 = vpack.c.b16 %v555, %v551
        %v604 = vpack.c.b16 %v556, %v552
        %v605 = vpack.c.b16 %v561, %v557
        %v606 = vpack.c.b16 %v562, %v558
        %v607 = vpack.c.b16 %v563, %v559
        %v608 = vpack.c.b16 %v564, %v560
        %v609 = vpack.c.b16 %v569, %v565
        %v610 = vpack.c.b16 %v570, %v566
        %v611 = vpack.c.b16 %v571, %v567
        %v612 = vpack.c.b16 %v572, %v568
        %v613 = vpack.c.b16 %v577, %v573
        %v614 = vpack.c.b16 %v578, %v574
        %v615 = vpack.c.b16 %v579, %v575
        %v616 = vpack.c.b16 %v580, %v576
        %v617 = vpack.c.b16 %v585, %v581
        %v618 = vpack.c.b16 %v586, %v582
        %v619 = vpack.c.b16 %v587, %v583
        %v620 = vpack.c.b16 %v588, %v584
        %653 = vmatprep.subr.bf16.mxu0 %v590
        %654 = vmatpush1.bf16.msra.mxu0 %v589
        %655 = vmatprep.subr.bf16.mxu0 %v594
        %656 = vmatpush1.bf16.msra.mxu0 %v593
        %657 = vmatprep.subr.bf16.mxu0 %v598
        %658 = vmatpush1.bf16.msra.mxu0 %v597
        %659 = vmatprep.subr.bf16.mxu0 %v602
        %660 = vmatpush1.bf16.msra.mxu0 %v601
        %661 = vmatprep.subr.bf16.mxu0 %v606
        %662 = vmatpush1.bf16.msra.mxu0 %v605
        %663 = vmatprep.subr.bf16.mxu0 %v610
        %664 = vmatpush1.bf16.msra.mxu0 %v609
        %665 = vmatprep.subr.bf16.mxu0 %v614
        %666 = vmatpush1.bf16.msra.mxu0 %v613
        %667 = vmatprep.subr.bf16.mxu0 %v618
        %668 = vmatpush1.bf16.msra.mxu0 %v617
        %669 = vmatprep.subr.bf16.mxu0 0
        %670 = vmatpush1.bf16.msra.mxu0 0
        %671 = vmatprep.subr.bf16.mxu0 0
        %672 = vmatpush1.bf16.msra.mxu0 0
        %673 = vmatprep.subr.bf16.mxu0 0
        %674 = vmatpush1.bf16.msra.mxu0 0
        %675 = vmatprep.subr.bf16.mxu0 0
        %676 = vmatpush1.bf16.msra.mxu0 0
        %677 = vmatprep.subr.bf16.mxu0 0
        %678 = vmatpush1.bf16.msra.mxu0 0
        %679 = vmatprep.subr.bf16.mxu0 0
        %680 = vmatpush1.bf16.msra.mxu0 0
        %681 = vmatprep.subr.bf16.mxu0 0
        %682 = vmatpush1.bf16.msra.mxu0 0
        %683 = vmatprep.subr.bf16.mxu0 0
        %684 = vmatpush1.bf16.msra.mxu0 0
        %685 = vmatprep.mubr.bf16.mxu0 0
        %686 = vmatmul.mubr.bf16.gmra.mrb[0].mxu0 %v491
        %v687 = vpop.f32.mrb[0].mxu0
        %v688 = vadd.f32 0.0, %v687
        %v689 = vpop.f32.mrb[0].mxu0
        %v690 = vadd.f32 0.0, %v689
        %v691 = vpop.f32.mrb[0].mxu0
        %v692 = vadd.f32 0.0, %v691
        %v693 = vpop.f32.mrb[0].mxu0
        %v694 = vadd.f32 0.0, %v693
        %695 = vdwg.mxu0
        %696 = vmatprep.subr.bf16.mxu0 %v592
        %697 = vmatpush1.bf16.msra.mxu0 %v591
        %698 = vmatprep.subr.bf16.mxu0 %v596
        %699 = vmatpush1.bf16.msra.mxu0 %v595
        %700 = vmatprep.subr.bf16.mxu0 %v600
        %701 = vmatpush1.bf16.msra.mxu0 %v599
        %702 = vmatprep.subr.bf16.mxu0 %v604
        %703 = vmatpush1.bf16.msra.mxu0 %v603
        %704 = vmatprep.subr.bf16.mxu0 %v608
        %705 = vmatpush1.bf16.msra.mxu0 %v607
        %706 = vmatprep.subr.bf16.mxu0 %v612
        %707 = vmatpush1.bf16.msra.mxu0 %v611
        %708 = vmatprep.subr.bf16.mxu0 %v616
        %709 = vmatpush1.bf16.msra.mxu0 %v615
        %710 = vmatprep.subr.bf16.mxu0 %v620
        %711 = vmatpush1.bf16.msra.mxu0 %v619
        %712 = vmatprep.subr.bf16.mxu0 0
        %713 = vmatpush1.bf16.msra.mxu0 0
        %714 = vmatprep.subr.bf16.mxu0 0
        %715 = vmatpush1.bf16.msra.mxu0 0
        %716 = vmatprep.subr.bf16.mxu0 0
        %717 = vmatpush1.bf16.msra.mxu0 0
        %718 = vmatprep.subr.bf16.mxu0 0
        %719 = vmatpush1.bf16.msra.mxu0 0
        %720 = vmatprep.subr.bf16.mxu0 0
        %721 = vmatpush1.bf16.msra.mxu0 0
        %722 = vmatprep.subr.bf16.mxu0 0
        %723 = vmatpush1.bf16.msra.mxu0 0
        %724 = vmatprep.subr.bf16.mxu0 0
        %725 = vmatpush1.bf16.msra.mxu0 0
        %726 = vmatprep.subr.bf16.mxu0 0
        %727 = vmatpush1.bf16.msra.mxu0 0
        %728 = vmatprep.mubr.bf16.mxu0 0
        %729 = vmatmul.mubr.bf16.gmra.mrb[0].mxu0 %v491
        %v730 = vpop.f32.mrb[0].mxu0
        %v731 = vadd.f32 0.0, %v730
        %v732 = vpop.f32.mrb[0].mxu0
        %v733 = vadd.f32 0.0, %v732
        %v734 = vpop.f32.mrb[0].mxu0
        %v735 = vadd.f32 0.0, %v734
        %v736 = vpop.f32.mrb[0].mxu0
        %v737 = vadd.f32 0.0, %v736
        %738 = vdwg.mxu0
        %s739 = scalar_lea.vmem %s2, 1
        %v740 = vld [vmem:[%s739] ss:$2 sm:$0x3]
        %v742 = vlaneseq
        %v743 = vshrl.u32 %v742, 7
        %v744 = vsub.s32 0, %v743
        %v745 = vrot.slane %v740, %v744
        %v746 = vlaneseq
        %v747 = vshrl.u32 %v746, 7
        %v748 = vsub.s32 1, %v747
        %v749 = vrot.slane %v740, %v748
        %v752 = vmul.f32 %v745, %v688
        %v753 = vmul.f32 %v749, %v690
        %v754 = vmul.f32 %v745, %v692
        %v755 = vmul.f32 %v749, %v694
        %v756 = vld [vmem:[%s3] sm:$0x3]
        %v758 = vlaneseq
        %v759 = vshrl.u32 %v758, 7
        %v760 = vsub.s32 0, %v759
        %v761 = vrot.slane %v756, %v760
        %v762 = vlaneseq
        %v763 = vshrl.u32 %v762, 7
        %v764 = vsub.s32 1, %v763
        %v765 = vrot.slane %v756, %v764
        %v768 = vadd.f32 %v752, %v761
        %v769 = vadd.f32 %v753, %v765
        %v770 = vadd.f32 %v754, %v761
        %v771 = vadd.f32 %v755, %v765
        %v772 = vld [vmem:[#allocation2] sm:$0x3]
        %v774 = vlaneseq
        %v775 = vshrl.u32 %v774, 7
        %v776 = vsub.s32 0, %v775
        %v777 = vrot.slane %v772, %v776
        %v778 = vlaneseq
        %v779 = vshrl.u32 %v778, 7
        %v780 = vsub.s32 1, %v779
        %v781 = vrot.slane %v772, %v780
        %vm788 = vcmask 1040384
        %v789 = vrot.slane %v688, 7
        %v790 = vrot.slane %v690, 7
        %v791 = vrot.slane %v692, 7
        %v792 = vsel %vm788, %v789, %v791
        %v793 = vrot.slane %v694, 7
        %v794 = vsel %vm788, %v790, %v793
        %v799 = vsel %vm788, %v777, %v789
        %v800 = vsel %vm788, %v781, %v790
        %v801 = vld [vmem:[%s2] ss:$2 sm:$0x3]
        %v803 = vlaneseq
        %v804 = vshrl.u32 %v803, 7
        %v805 = vsub.s32 0, %v804
        %v806 = vrot.slane %v801, %v805
        %v807 = vlaneseq
        %v808 = vshrl.u32 %v807, 7
        %v809 = vsub.s32 1, %v808
        %v810 = vrot.slane %v801, %v809
        %v813 = vmul.f32 %v806, %v799
        %v814 = vmul.f32 %v810, %v800
        %v815 = vmul.f32 %v806, %v792
        %v816 = vmul.f32 %v810, %v794
        %v817 = vadd.f32 %v768, %v813
        %v818 = vadd.f32 %v769, %v814
        %v819 = vadd.f32 %v770, %v815
        %v820 = vadd.f32 %v771, %v816
        %v821 = vcombine.high %v692, %v694
        %v823 = vunpack.c.l.s4 1966171168
        %v824 = vunpack.c.0.s8 %v823
        %v825 = vlaneseq
        %v826 = vshrl.u32 %v825, 7
        %v827 = vsub.s32 %v824, %v826
        %v828 = vrot.slane %v821, %v827
        %v829 = vcombine.high %v828, %v828
        %v831 = vunpack.c.l.s4 1966171168
        %v832 = vunpack.c.0.s8 %v831
        %v833 = vlaneseq
        %v834 = vshrl.u32 %v833, 7
        %v835 = vsub.s32 %v832, %v834
        %v836 = vrot.slane %v829, %v835
        %v837 = vcombine.high %v836, %v836
        %v839 = vlaneseq
        %vm840 = vcmp.ge.s32.totalorder %v839, 0
        %vm841 = vcmp.lt.s32.totalorder %v839, 256
        %vm842 = vmand %vm840, %vm841
        %843 = vst.msk [vmem:[#allocation2] sm:$0x3] %vm842, %v837
        %v844 = vsub.f32 0.0, %v817
        %v845 = vsub.f32 0.0, %v818
        %v846 = vsub.f32 0.0, %v819
        %v847 = vsub.f32 0.0, %v820
        %v848 = vmul.f32 %v844, 1.442695
        %v849 = vpow.pop %v848
        %v850 = vmul.f32 %v845, 1.442695
        %v851 = vpow.pop %v850
        %v852 = vmul.f32 %v846, 1.442695
        %v853 = vpow.pop %v852
        %v854 = vmul.f32 %v847, 1.442695
        %v855 = vpow.pop %v854
        %v856 = vadd.f32 %v849, 1.0
        %v857 = vadd.f32 %v851, 1.0
        %v858 = vadd.f32 %v853, 1.0
        %v859 = vadd.f32 %v855, 1.0
        %v860 = vrcp.pop %v856
        %v861 = vrcp.pop %v857
        %v862 = vrcp.pop %v858
        %v863 = vrcp.pop %v859
        %v864 = vmul.f32 %v817, %v860
        %v865 = vmul.f32 %v818, %v861
        %v866 = vmul.f32 %v819, %v862
        %v867 = vmul.f32 %v820, %v863
        %v868 = vpack.c.bf16 %v866, %v864
        %v869 = vpack.c.bf16 %v867, %v865
        %v870 = vld [vmem:[#allocation13] sm:$0xff]
        %v871 = vld [vmem:[#allocation13 + $0x8] sm:$0xff]
        %v872 = vld [vmem:[#allocation13 + $0x10] sm:$0xff]
        %v873 = vld [vmem:[#allocation13 + $0x18] sm:$0xff]
        %v874 = vld [vmem:[#allocation13 + $0x20] sm:$0xff]
        %v875 = vld [vmem:[#allocation13 + $0x28] sm:$0xff]
        %v876 = vld [vmem:[#allocation13 + $0x30] sm:$0xff]
        %v877 = vld [vmem:[#allocation13 + $0x38] sm:$0xff]
        %v878 = vld [vmem:[#allocation13 + $0x40] sm:$0xff]
        %v879 = vld [vmem:[#allocation13 + $0x48] sm:$0xff]
        %v880 = vld [vmem:[#allocation13 + $0x50] sm:$0xff]
        %v881 = vld [vmem:[#allocation13 + $0x58] sm:$0xff]
        %v882 = vld [vmem:[#allocation13 + $0x60] sm:$0xff]
        %v883 = vld [vmem:[#allocation13 + $0x68] sm:$0xff]
        %v884 = vld [vmem:[#allocation13 + $0x70] sm:$0xff]
        %v885 = vld [vmem:[#allocation13 + $0x78] sm:$0xff]
        %v886 = vld [vmem:[#allocation13 + $0x80] sm:$0xff]
        %v887 = vld [vmem:[#allocation13 + $0x88] sm:$0xff]
        %v888 = vld [vmem:[#allocation13 + $0x90] sm:$0xff]
        %v889 = vld [vmem:[#allocation13 + $0x98] sm:$0xff]
        %v890 = vld [vmem:[#allocation13 + $0xa0] sm:$0xff]
        %v891 = vld [vmem:[#allocation13 + $0xa8] sm:$0xff]
        %v892 = vld [vmem:[#allocation13 + $0xb0] sm:$0xff]
        %v893 = vld [vmem:[#allocation13 + $0xb8] sm:$0xff]
        %v894 = vld [vmem:[#allocation13 + $0xc0] sm:$0xff]
        %v895 = vld [vmem:[#allocation13 + $0xc8] sm:$0xff]
        %v896 = vld [vmem:[#allocation13 + $0xd0] sm:$0xff]
        %v897 = vld [vmem:[#allocation13 + $0xd8] sm:$0xff]
        %v898 = vld [vmem:[#allocation13 + $0xe0] sm:$0xff]
        %v899 = vld [vmem:[#allocation13 + $0xe8] sm:$0xff]
        %v900 = vld [vmem:[#allocation13 + $0xf0] sm:$0xff]
        %v901 = vld [vmem:[#allocation13 + $0xf8] sm:$0xff]
        %v934 = vunpack.c.l.b16 %v870
        %v935 = vunpack.c.h.b16 %v870
        %v936 = vunpack.c.l.b16 %v871
        %v937 = vunpack.c.h.b16 %v871
        %v938 = vunpack.c.l.b16 %v872
        %v939 = vunpack.c.h.b16 %v872
        %v940 = vunpack.c.l.b16 %v873
        %v941 = vunpack.c.h.b16 %v873
        %v942 = vunpack.c.l.b16 %v874
        %v943 = vunpack.c.h.b16 %v874
        %v944 = vunpack.c.l.b16 %v875
        %v945 = vunpack.c.h.b16 %v875
        %v946 = vunpack.c.l.b16 %v876
        %v947 = vunpack.c.h.b16 %v876
        %v948 = vunpack.c.l.b16 %v877
        %v949 = vunpack.c.h.b16 %v877
        %v950 = vunpack.c.l.b16 %v878
        %v951 = vunpack.c.h.b16 %v878
        %v952 = vunpack.c.l.b16 %v879
        %v953 = vunpack.c.h.b16 %v879
        %v954 = vunpack.c.l.b16 %v880
        %v955 = vunpack.c.h.b16 %v880
        %v956 = vunpack.c.l.b16 %v881
        %v957 = vunpack.c.h.b16 %v881
        %v958 = vunpack.c.l.b16 %v882
        %v959 = vunpack.c.h.b16 %v882
        %v960 = vunpack.c.l.b16 %v883
        %v961 = vunpack.c.h.b16 %v883
        %v962 = vunpack.c.l.b16 %v884
        %v963 = vunpack.c.h.b16 %v884
        %v964 = vunpack.c.l.b16 %v885
        %v965 = vunpack.c.h.b16 %v885
        %v966 = vunpack.c.l.b16 %v886
        %v967 = vunpack.c.h.b16 %v886
        %v968 = vunpack.c.l.b16 %v887
        %v969 = vunpack.c.h.b16 %v887
        %v970 = vunpack.c.l.b16 %v888
        %v971 = vunpack.c.h.b16 %v888
        %v972 = vunpack.c.l.b16 %v889
        %v973 = vunpack.c.h.b16 %v889
        %v974 = vunpack.c.l.b16 %v890
        %v975 = vunpack.c.h.b16 %v890
        %v976 = vunpack.c.l.b16 %v891
        %v977 = vunpack.c.h.b16 %v891
        %v978 = vunpack.c.l.b16 %v892
        %v979 = vunpack.c.h.b16 %v892
        %v980 = vunpack.c.l.b16 %v893
        %v981 = vunpack.c.h.b16 %v893
        %v982 = vunpack.c.l.b16 %v894
        %v983 = vunpack.c.h.b16 %v894
        %v984 = vunpack.c.l.b16 %v895
        %v985 = vunpack.c.h.b16 %v895
        %v986 = vunpack.c.l.b16 %v896
        %v987 = vunpack.c.h.b16 %v896
        %v988 = vunpack.c.l.b16 %v897
        %v989 = vunpack.c.h.b16 %v897
        %v990 = vunpack.c.l.b16 %v898
        %v991 = vunpack.c.h.b16 %v898
        %v992 = vunpack.c.l.b16 %v899
        %v993 = vunpack.c.h.b16 %v899
        %v994 = vunpack.c.l.b16 %v900
        %v995 = vunpack.c.h.b16 %v900
        %v996 = vunpack.c.l.b16 %v901
        %v997 = vunpack.c.h.b16 %v901
        %v998 = vpack.c.b16 %v936, %v934
        %v999 = vpack.c.b16 %v937, %v935
        %v1000 = vpack.c.b16 %v940, %v938
        %v1001 = vpack.c.b16 %v941, %v939
        %v1002 = vpack.c.b16 %v944, %v942
        %v1003 = vpack.c.b16 %v945, %v943
        %v1004 = vpack.c.b16 %v948, %v946
        %v1005 = vpack.c.b16 %v949, %v947
        %v1006 = vpack.c.b16 %v952, %v950
        %v1007 = vpack.c.b16 %v953, %v951
        %v1008 = vpack.c.b16 %v956, %v954
        %v1009 = vpack.c.b16 %v957, %v955
        %v1010 = vpack.c.b16 %v960, %v958
        %v1011 = vpack.c.b16 %v961, %v959
        %v1012 = vpack.c.b16 %v964, %v962
        %v1013 = vpack.c.b16 %v965, %v963
        %v1014 = vpack.c.b16 %v968, %v966
        %v1015 = vpack.c.b16 %v969, %v967
        %v1016 = vpack.c.b16 %v972, %v970
        %v1017 = vpack.c.b16 %v973, %v971
        %v1018 = vpack.c.b16 %v976, %v974
        %v1019 = vpack.c.b16 %v977, %v975
        %v1020 = vpack.c.b16 %v980, %v978
        %v1021 = vpack.c.b16 %v981, %v979
        %v1022 = vpack.c.b16 %v984, %v982
        %v1023 = vpack.c.b16 %v985, %v983
        %v1024 = vpack.c.b16 %v988, %v986
        %v1025 = vpack.c.b16 %v989, %v987
        %v1026 = vpack.c.b16 %v992, %v990
        %v1027 = vpack.c.b16 %v993, %v991
        %v1028 = vpack.c.b16 %v996, %v994
        %v1029 = vpack.c.b16 %v997, %v995
        %1062 = vmatprep.subr.bf16.mxu0 %v999
        %1063 = vmatpush1.bf16.msra.mxu0 %v998
        %1064 = vmatprep.subr.bf16.mxu0 %v1001
        %1065 = vmatpush1.bf16.msra.mxu0 %v1000
        %1066 = vmatprep.subr.bf16.mxu0 %v1003
        %1067 = vmatpush1.bf16.msra.mxu0 %v1002
        %1068 = vmatprep.subr.bf16.mxu0 %v1005
        %1069 = vmatpush1.bf16.msra.mxu0 %v1004
        %1070 = vmatprep.subr.bf16.mxu0 %v1007
        %1071 = vmatpush1.bf16.msra.mxu0 %v1006
        %1072 = vmatprep.subr.bf16.mxu0 %v1009
        %1073 = vmatpush1.bf16.msra.mxu0 %v1008
        %1074 = vmatprep.subr.bf16.mxu0 %v1011
        %1075 = vmatpush1.bf16.msra.mxu0 %v1010
        %1076 = vmatprep.subr.bf16.mxu0 %v1013
        %1077 = vmatpush1.bf16.msra.mxu0 %v1012
        %1078 = vmatprep.subr.bf16.mxu0 %v1015
        %1079 = vmatpush1.bf16.msra.mxu0 %v1014
        %1080 = vmatprep.subr.bf16.mxu0 %v1017
        %1081 = vmatpush1.bf16.msra.mxu0 %v1016
        %1082 = vmatprep.subr.bf16.mxu0 %v1019
        %1083 = vmatpush1.bf16.msra.mxu0 %v1018
        %1084 = vmatprep.subr.bf16.mxu0 %v1021
        %1085 = vmatpush1.bf16.msra.mxu0 %v1020
        %1086 = vmatprep.subr.bf16.mxu0 %v1023
        %1087 = vmatpush1.bf16.msra.mxu0 %v1022
        %1088 = vmatprep.subr.bf16.mxu0 %v1025
        %1089 = vmatpush1.bf16.msra.mxu0 %v1024
        %1090 = vmatprep.subr.bf16.mxu0 %v1027
        %1091 = vmatpush1.bf16.msra.mxu0 %v1026
        %1092 = vmatprep.subr.bf16.mxu0 %v1029
        %1093 = vmatpush1.bf16.msra.mxu0 %v1028
        %1094 = vmatprep.mubr.bf16.mxu0 %v869
        %1095 = vmatmul.mubr.bf16.gmra.mrb[0].mxu0 %v868
        %v1096 = vpop.f32.mrb[0].mxu0
        %v1097 = vadd.f32 0.0, %v1096
        %v1098 = vpop.f32.mrb[0].mxu0
        %v1099 = vadd.f32 0.0, %v1098
        %v1100 = vpop.f32.mrb[0].mxu0
        %v1101 = vadd.f32 0.0, %v1100
        %v1102 = vpop.f32.mrb[0].mxu0
        %v1103 = vadd.f32 0.0, %v1102
        %1104 = vdwg.mxu0
        %1105 = vst [vmem:[#allocation6] sm:$0xff] %v1097
        %1106 = vst [vmem:[#allocation6 + $0x8] sm:$0xff] %v1101
        %v1107 = vpack.c.bf16 %v1103, %v1099
        %v1108 = vld [vmem:[%s5] sm:$0xff]
        %v1109 = vld [vmem:[%s6] sm:$0x3]
        %v1111 = vlaneseq
        %v1112 = vshrl.u32 %v1111, 7
        %v1113 = vsub.s32 0, %v1112
        %v1114 = vrot.slane %v1109, %v1113
        %v1115 = vlaneseq
        %v1116 = vshrl.u32 %v1115, 7
        %v1117 = vsub.s32 1, %v1116
        %v1118 = vrot.slane %v1109, %v1117
        %v1122 = vunpack.c.l.b16 %v1108
        %v1123 = vunpack.c.h.b16 %v1108
        %v1124 = vpack.c.b16 %v1122, %v1122
        %v1125 = vpack.c.b16 %v1123, %v1123
        %vm1126 = vcmask 64512
        %v1128 = vsel %vm1126, %v1107, 0
        %vm1130 = vcmask 1043456
        %v1132 = vsel %vm1130, %v1124, 0
        %v1135 = vsel %vm1130, %v1125, 0
        %1137 = vmatprep.subr.bf16.mxu0 %v1135
        %1138 = vmatpush1.bf16.msra.mxu0 %v1132
        %1139 = vmatprep.subr.bf16.mxu0 0
        %1140 = vmatpush1.bf16.msra.mxu0 0
        %1141 = vmatprep.subr.bf16.mxu0 0
        %1142 = vmatpush1.bf16.msra.mxu0 0
        %1143 = vmatprep.subr.bf16.mxu0 0
        %1144 = vmatpush1.bf16.msra.mxu0 0
        %1145 = vmatprep.subr.bf16.mxu0 0
        %1146 = vmatpush1.bf16.msra.mxu0 0
        %1147 = vmatprep.subr.bf16.mxu0 0
        %1148 = vmatpush1.bf16.msra.mxu0 0
        %1149 = vmatprep.subr.bf16.mxu0 0
        %1150 = vmatpush1.bf16.msra.mxu0 0
        %1151 = vmatprep.subr.bf16.mxu0 0
        %1152 = vmatpush1.bf16.msra.mxu0 0
        %1153 = vmatprep.subr.bf16.mxu0 0
        %1154 = vmatpush1.bf16.msra.mxu0 0
        %1155 = vmatprep.subr.bf16.mxu0 0
        %1156 = vmatpush1.bf16.msra.mxu0 0
        %1157 = vmatprep.subr.bf16.mxu0 0
        %1158 = vmatpush1.bf16.msra.mxu0 0
        %1159 = vmatprep.subr.bf16.mxu0 0
        %1160 = vmatpush1.bf16.msra.mxu0 0
        %1161 = vmatprep.subr.bf16.mxu0 0
        %1162 = vmatpush1.bf16.msra.mxu0 0
        %1163 = vmatprep.subr.bf16.mxu0 0
        %1164 = vmatpush1.bf16.msra.mxu0 0
        %1165 = vmatprep.subr.bf16.mxu0 0
        %1166 = vmatpush1.bf16.msra.mxu0 0
        %1167 = vmatprep.subr.bf16.mxu0 0
        %1168 = vmatpush1.bf16.msra.mxu0 0
        %1169 = vmatprep.mubr.bf16.mxu0 0
        %1170 = vmatmul.mubr.bf16.gmra.mrb[0].mxu0 %v1128
        %v1171 = vpop.f32.mrb[0].mxu0
        %v1172 = vadd.f32 %v1114, %v1171
        %v1173 = vpop.f32.mrb[0].mxu0
        %v1174 = vadd.f32 %v1118, %v1173
        %v1175 = vpop.f32.mrb[0].mxu0
        %v1176 = vadd.f32 %v1114, %v1175
        %v1177 = vpop.f32.mrb[0].mxu0
        %v1178 = vadd.f32 %v1118, %v1177
        %1179 = vdwg.mxu0
        %v1180 = vmax.f32 %v1172, 0.0
        %v1181 = vmax.f32 %v1174, 0.0
        %v1182 = vmax.f32 %v1176, 0.0
        %v1183 = vmax.f32 %v1178, 0.0
        %v1184 = vand.u32 2147483647, %v1172
        %v1185 = vand.u32 2147483647, %v1174
        %v1186 = vand.u32 2147483647, %v1176
        %v1187 = vand.u32 2147483647, %v1178
        %v1188 = vsub.f32 0.0, %v1184
        %v1189 = vsub.f32 0.0, %v1185
        %v1190 = vsub.f32 0.0, %v1186
        %v1191 = vsub.f32 0.0, %v1187
        %v1192 = vmul.f32 %v1188, 1.442695
        %v1193 = vpow.pop %v1192
        %v1194 = vmul.f32 %v1189, 1.442695
        %v1195 = vpow.pop %v1194
        %v1196 = vmul.f32 %v1190, 1.442695
        %v1197 = vpow.pop %v1196
        %v1198 = vmul.f32 %v1191, 1.442695
        %v1199 = vpow.pop %v1198
        %v1200 = vadd.f32 %v1193, 1.0
        %v1201 = vadd.f32 %v1195, 1.0
        %v1202 = vadd.f32 %v1197, 1.0
        %v1203 = vadd.f32 %v1199, 1.0
        %v1204 = vlog2.pop %v1200
        %v1205 = vmul.f32 %v1204, 0.6931472
        %v1206 = vlog2.pop %v1201
        %v1207 = vmul.f32 %v1206, 0.6931472
        %v1208 = vlog2.pop %v1202
        %v1209 = vmul.f32 %v1208, 0.6931472
        %v1210 = vlog2.pop %v1203
        %v1211 = vmul.f32 %v1210, 0.6931472
        %v1212 = vadd.f32 %v1180, %v1205
        %v1213 = vadd.f32 %v1181, %v1207
        %v1214 = vadd.f32 %v1182, %v1209
        %v1215 = vadd.f32 %v1183, %v1211
        %1216 = vst [vmem:[#allocation4] sm:$0xff] %v1212
        %1217 = vst [vmem:[#allocation4 + $0x8] sm:$0xff] %v1213
        %1218 = vst [vmem:[#allocation4 + $0x10] sm:$0xff] %v1214
        %1219 = vst [vmem:[#allocation4 + $0x18] sm:$0xff] %v1215
        %v1220 = vmul.f32 %v1212, %v864
        %v1221 = vmul.f32 %v1213, %v865
        %v1222 = vmul.f32 %v1214, %v866
        %v1223 = vmul.f32 %v1215, %v867
        %1224 = vst [vmem:[#allocation5] sm:$0xff] %v1220
        %1225 = vst [vmem:[#allocation5 + $0x8] sm:$0xff] %v1221
        %1226 = vst [vmem:[#allocation5 + $0x10] sm:$0xff] %v1222
        %1227 = vst [vmem:[#allocation5 + $0x18] sm:$0xff] %v1223
        %v1228 = vld [vmem:[%s7] sm:$0xf]
        %v1229 = vmul.f32 %v1228, 1.442695
        %v1230 = vpow.pop %v1229
        %v1231 = vsub.f32 0.0, %v1230
        %v1232 = vld [vmem:[#allocation3] sm:$0xf]
        %v1235 = vunpack.c.l.s4 1983009808
        %v1236 = vunpack.c.0.s8 %v1235
        %v1237 = vlaneseq
        %v1238 = vshrl.u32 %v1237, 7
        %v1239 = vsub.s32 %v1236, %v1238
        %v1240 = vrot.slane %v1232, %v1239
        %v1241 = vcombine.high %v1240, %v1240
        loop: start=0, step=1, limit=2
        $region81: #{tpu_custom_call.1} parent=59 // loop_pre_header
          _
        $region82: #{tpu_custom_call.1} parent=59 // loop_header
          %s1245 = sphi 0, %s1249
          %p1246 = scmp.ge.s32.totalorder %s1245, 2
          %v1250 = vphi %v1240, %v1761
          %v1251 = vphi %v1241, %v1762
        $region83: #{tpu_custom_call.1} parent=59 // loop_header_branch
          %1248 = sbr.rel (%p1246) target = $region87
        $region84: #{tpu_custom_call.1} parent=59 // loop_body
          %s1252 = smul.u32 %s1245, 8
          %s1253 = sshra.s32 %s1252, 3
          %s1254 = sand.u32 %s1252, 7
          %s1255 = smul.u32 %s1253, 2
          %s1256 = smul.addr %s1255, 8
          %s1257 = scalar_lea.vmem [#allocation4], %s1256
          %v1258 = vld [vmem:[%s1257] sm:$0xff]
          %v1259 = vld [vmem:[%s1257 + $0x8] sm:$0xff]
          %s1260 = smul.addr %s1255, 8
          %s1261 = scalar_lea.vmem [#allocation5], %s1260
          %v1262 = vld [vmem:[%s1261] sm:$0xff]
          %v1263 = vld [vmem:[%s1261 + $0x8] sm:$0xff]
          %s1264 = scalar_lea.vmem [#allocation6], %s1252
          %v1265 = vld [vmem:[%s1264] sm:$0xff]
          %1266 = vxpose.xlu0.b32.start [1/16] %v1265, 128
          %1267 = vxpose.xlu0.b32.cont [2/16] 0.0, 128
          %1268 = vxpose.xlu0.b32.cont [3/16] 0.0, 128
          %1269 = vxpose.xlu0.b32.cont [4/16] 0.0, 128
          %1270 = vxpose.xlu0.b32.cont [5/16] 0.0, 128
          %1271 = vxpose.xlu0.b32.cont [6/16] 0.0, 128
          %1272 = vxpose.xlu0.b32.cont [7/16] 0.0, 128
          %1273 = vxpose.xlu0.b32.cont [8/16] 0.0, 128
          %1274 = vxpose.xlu0.b32.cont [9/16] 0.0, 128
          %1275 = vxpose.xlu0.b32.cont [10/16] 0.0, 128
          %1276 = vxpose.xlu0.b32.cont [11/16] 0.0, 128
          %1277 = vxpose.xlu0.b32.cont [12/16] 0.0, 128
          %1278 = vxpose.xlu0.b32.cont [13/16] 0.0, 128
          %1279 = vxpose.xlu0.b32.cont [14/16] 0.0, 128
          %1280 = vxpose.xlu0.b32.cont [15/16] 0.0, 128
          %1281 = vxpose.xlu0.b32.end [16/16] 0.0, 128
          %v1282 = vpop.trf.xlu0
          %v1283 = vpop.trf.xlu0
          %v1284 = vpop.trf.xlu0
          %v1285 = vpop.trf.xlu0
          %v1286 = vpop.trf.xlu0
          %v1287 = vpop.trf.xlu0
          %v1288 = vpop.trf.xlu0
          %v1289 = vpop.trf.xlu0
          %v1290 = vpop.trf.xlu0
          %v1291 = vpop.trf.xlu0
          %v1292 = vpop.trf.xlu0
          %v1293 = vpop.trf.xlu0
          %v1294 = vpop.trf.xlu0
          %v1295 = vpop.trf.xlu0
          %v1296 = vpop.trf.xlu0
          %v1297 = vpop.trf.xlu0
          %v1298 = vlaneseq
          %v1299 = vshrl.u32 %v1298, 7
          %v1300 = vsub.s32 0, %v1299
          %v1301 = vrot.slane %v1258, %v1300
          %v1302 = vlaneseq
          %v1303 = vshrl.u32 %v1302, 7
          %v1304 = vsub.s32 0, %v1303
          %v1305 = vrot.slane %v1259, %v1304
          %v1308 = vunpack.c.l.s4 1983009808
          %v1309 = vunpack.c.0.s8 %v1308
          %v1310 = vlaneseq
          %v1311 = vshrl.u32 %v1310, 7
          %v1312 = vsub.s32 %v1309, %v1311
          %v1313 = vrot.slane %v1231, %v1312
          %v1314 = vcombine.high %v1313, %v1313
          %v1317 = vmul.f32 %v1301, %v1313
          %v1318 = vmul.f32 %v1305, %v1314
          %v1319 = vmul.f32 %v1317, 1.442695
          %v1320 = vpow.pop %v1319
          %v1321 = vmul.f32 %v1318, 1.442695
          %v1322 = vpow.pop %v1321
          %v1323 = vmul.f32 %v1320, %v1250
          %v1324 = vmul.f32 %v1322, %v1251
          %1326 = vset.pattern.permute.xlu0 0
          %1327 = vperm.xlu0 %1326, %v1282
          %v1328 = vpop.permute.xlu0 %1327
          %v1330 = vlaneseq
          %v1331 = vshrl.u32 %v1330, 7
          %v1332 = vsub.s32 0, %v1331
          %v1333 = vrot.slane %v1262, %v1332
          %v1334 = vlaneseq
          %v1335 = vshrl.u32 %v1334, 7
          %v1336 = vsub.s32 0, %v1335
          %v1337 = vrot.slane %v1263, %v1336
          %v1338 = vmul.f32 %v1328, %v1333
          %v1339 = vmul.f32 %v1328, %v1337
          %v1340 = vadd.f32 %v1323, %v1338
          %v1341 = vadd.f32 %v1324, %v1339
          %v1344 = vrot.slane %v1340, 6
          %v1345 = vrot.slane %v1341, 6
          %v1348 = vmul.f32 %v1328, %v1344
          %v1349 = vmul.f32 %v1328, %v1345
          %v1352 = vrot.slane %v1348, 2
          %v1353 = vrot.slane %v1349, 2
          %vm1356 = vcmask 1041408
          %v1357 = vsel %vm1356, %v1352, 0.0
          %v1358 = vrot.slane %v1357, 4
          %v1359 = vadd.f32 %v1357, %v1358
          %v1360 = vrot.slane %v1359, 2
          %v1361 = vadd.f32 %v1359, %v1360
          %v1362 = vrot.slane %v1361, 1
          %v1363 = vadd.f32 %v1361, %v1362
          %v1364 = vsel %vm1356, %v1353, 0.0
          %v1365 = vrot.slane %v1364, 4
          %v1366 = vadd.f32 %v1364, %v1365
          %v1367 = vrot.slane %v1366, 2
          %v1368 = vadd.f32 %v1366, %v1367
          %v1369 = vrot.slane %v1368, 1
          %v1370 = vadd.f32 %v1368, %v1369
          %v1371 = vlaneseq
          %v1372 = vshrl.u32 %v1371, 7
          %v1373 = vsub.s32 1, %v1372
          %v1374 = vrot.slane %v1258, %v1373
          %v1375 = vlaneseq
          %v1376 = vshrl.u32 %v1375, 7
          %v1377 = vsub.s32 1, %v1376
          %v1378 = vrot.slane %v1259, %v1377
          %v1379 = vmul.f32 %v1374, %v1313
          %v1380 = vmul.f32 %v1378, %v1314
          %v1381 = vmul.f32 %v1379, 1.442695
          %v1382 = vpow.pop %v1381
          %v1383 = vmul.f32 %v1380, 1.442695
          %v1384 = vpow.pop %v1383
          %v1385 = vmul.f32 %v1382, %v1340
          %v1386 = vmul.f32 %v1384, %v1341
          %1387 = vset.pattern.permute.xlu0 1
          %1388 = vperm.xlu0 %1387, %v1282
          %v1389 = vpop.permute.xlu0 %1388
          %v1391 = vlaneseq
          %v1392 = vshrl.u32 %v1391, 7
          %v1393 = vsub.s32 1, %v1392
          %v1394 = vrot.slane %v1262, %v1393
          %v1395 = vlaneseq
          %v1396 = vshrl.u32 %v1395, 7
          %v1397 = vsub.s32 1, %v1396
          %v1398 = vrot.slane %v1263, %v1397
          %v1399 = vmul.f32 %v1389, %v1394
          %v1400 = vmul.f32 %v1389, %v1398
          %v1401 = vadd.f32 %v1385, %v1399
          %v1402 = vadd.f32 %v1386, %v1400
          %v1405 = vrot.slane %v1401, 6
          %v1406 = vrot.slane %v1402, 6
          %v1409 = vmul.f32 %v1389, %v1405
          %v1410 = vmul.f32 %v1389, %v1406
          %v1413 = vrot.slane %v1409, 2
          %v1414 = vrot.slane %v1410, 2
          %v1417 = vsel %vm1356, %v1413, 0.0
          %v1418 = vrot.slane %v1417, 4
          %v1419 = vadd.f32 %v1417, %v1418
          %v1420 = vrot.slane %v1419, 2
          %v1421 = vadd.f32 %v1419, %v1420
          %v1422 = vrot.slane %v1421, 1
          %v1423 = vadd.f32 %v1421, %v1422
          %v1424 = vsel %vm1356, %v1414, 0.0
          %v1425 = vrot.slane %v1424, 4
          %v1426 = vadd.f32 %v1424, %v1425
          %v1427 = vrot.slane %v1426, 2
          %v1428 = vadd.f32 %v1426, %v1427
          %v1429 = vrot.slane %v1428, 1
          %v1430 = vadd.f32 %v1428, %v1429
          %v1431 = vlaneseq
          %v1432 = vshrl.u32 %v1431, 7
          %v1433 = vsub.s32 2, %v1432
          %v1434 = vrot.slane %v1258, %v1433
          %v1435 = vlaneseq
          %v1436 = vshrl.u32 %v1435, 7
          %v1437 = vsub.s32 2, %v1436
          %v1438 = vrot.slane %v1259, %v1437
          %v1439 = vmul.f32 %v1434, %v1313
          %v1440 = vmul.f32 %v1438, %v1314
          %v1441 = vmul.f32 %v1439, 1.442695
          %v1442 = vpow.pop %v1441
          %v1443 = vmul.f32 %v1440, 1.442695
          %v1444 = vpow.pop %v1443
          %v1445 = vmul.f32 %v1442, %v1401
          %v1446 = vmul.f32 %v1444, %v1402
          %1447 = vset.pattern.permute.xlu0 2
          %1448 = vperm.xlu0 %1447, %v1282
          %v1449 = vpop.permute.xlu0 %1448
          %v1451 = vlaneseq
          %v1452 = vshrl.u32 %v1451, 7
          %v1453 = vsub.s32 2, %v1452
          %v1454 = vrot.slane %v1262, %v1453
          %v1455 = vlaneseq
          %v1456 = vshrl.u32 %v1455, 7
          %v1457 = vsub.s32 2, %v1456
          %v1458 = vrot.slane %v1263, %v1457
          %v1459 = vmul.f32 %v1449, %v1454
          %v1460 = vmul.f32 %v1449, %v1458
          %v1461 = vadd.f32 %v1445, %v1459
          %v1462 = vadd.f32 %v1446, %v1460
          %v1465 = vrot.slane %v1461, 6
          %v1466 = vrot.slane %v1462, 6
          %v1469 = vmul.f32 %v1449, %v1465
          %v1470 = vmul.f32 %v1449, %v1466
          %v1473 = vrot.slane %v1469, 2
          %v1474 = vrot.slane %v1470, 2
          %v1477 = vsel %vm1356, %v1473, 0.0
          %v1478 = vrot.slane %v1477, 4
          %v1479 = vadd.f32 %v1477, %v1478
          %v1480 = vrot.slane %v1479, 2
          %v1481 = vadd.f32 %v1479, %v1480
          %v1482 = vrot.slane %v1481, 1
          %v1483 = vadd.f32 %v1481, %v1482
          %v1484 = vsel %vm1356, %v1474, 0.0
          %v1485 = vrot.slane %v1484, 4
          %v1486 = vadd.f32 %v1484, %v1485
          %v1487 = vrot.slane %v1486, 2
          %v1488 = vadd.f32 %v1486, %v1487
          %v1489 = vrot.slane %v1488, 1
          %v1490 = vadd.f32 %v1488, %v1489
          %v1491 = vlaneseq
          %v1492 = vshrl.u32 %v1491, 7
          %v1493 = vsub.s32 3, %v1492
          %v1494 = vrot.slane %v1258, %v1493
          %v1495 = vlaneseq
          %v1496 = vshrl.u32 %v1495, 7
          %v1497 = vsub.s32 3, %v1496
          %v1498 = vrot.slane %v1259, %v1497
          %v1499 = vmul.f32 %v1494, %v1313
          %v1500 = vmul.f32 %v1498, %v1314
          %v1501 = vmul.f32 %v1499, 1.442695
          %v1502 = vpow.pop %v1501
          %v1503 = vmul.f32 %v1500, 1.442695
          %v1504 = vpow.pop %v1503
          %v1505 = vmul.f32 %v1502, %v1461
          %v1506 = vmul.f32 %v1504, %v1462
          %1507 = vset.pattern.permute.xlu0 3
          %1508 = vperm.xlu0 %1507, %v1282
          %v1509 = vpop.permute.xlu0 %1508
          %v1511 = vlaneseq
          %v1512 = vshrl.u32 %v1511, 7
          %v1513 = vsub.s32 3, %v1512
          %v1514 = vrot.slane %v1262, %v1513
          %v1515 = vlaneseq
          %v1516 = vshrl.u32 %v1515, 7
          %v1517 = vsub.s32 3, %v1516
          %v1518 = vrot.slane %v1263, %v1517
          %v1519 = vmul.f32 %v1509, %v1514
          %v1520 = vmul.f32 %v1509, %v1518
          %v1521 = vadd.f32 %v1505, %v1519
          %v1522 = vadd.f32 %v1506, %v1520
          %v1525 = vrot.slane %v1521, 6
          %v1526 = vrot.slane %v1522, 6
          %v1529 = vmul.f32 %v1509, %v1525
          %v1530 = vmul.f32 %v1509, %v1526
          %v1533 = vrot.slane %v1529, 2
          %v1534 = vrot.slane %v1530, 2
          %v1537 = vsel %vm1356, %v1533, 0.0
          %v1538 = vrot.slane %v1537, 4
          %v1539 = vadd.f32 %v1537, %v1538
          %v1540 = vrot.slane %v1539, 2
          %v1541 = vadd.f32 %v1539, %v1540
          %v1542 = vrot.slane %v1541, 1
          %v1543 = vadd.f32 %v1541, %v1542
          %v1544 = vsel %vm1356, %v1534, 0.0
          %v1545 = vrot.slane %v1544, 4
          %v1546 = vadd.f32 %v1544, %v1545
          %v1547 = vrot.slane %v1546, 2
          %v1548 = vadd.f32 %v1546, %v1547
          %v1549 = vrot.slane %v1548, 1
          %v1550 = vadd.f32 %v1548, %v1549
          %v1551 = vlaneseq
          %v1552 = vshrl.u32 %v1551, 7
          %v1553 = vsub.s32 4, %v1552
          %v1554 = vrot.slane %v1258, %v1553
          %v1555 = vlaneseq
          %v1556 = vshrl.u32 %v1555, 7
          %v1557 = vsub.s32 4, %v1556
          %v1558 = vrot.slane %v1259, %v1557
          %v1559 = vmul.f32 %v1554, %v1313
          %v1560 = vmul.f32 %v1558, %v1314
          %v1561 = vmul.f32 %v1559, 1.442695
          %v1562 = vpow.pop %v1561
          %v1563 = vmul.f32 %v1560, 1.442695
          %v1564 = vpow.pop %v1563
          %v1565 = vmul.f32 %v1562, %v1521
          %v1566 = vmul.f32 %v1564, %v1522
          %1567 = vset.pattern.permute.xlu0 4
          %1568 = vperm.xlu0 %1567, %v1282
          %v1569 = vpop.permute.xlu0 %1568
          %v1571 = vlaneseq
          %v1572 = vshrl.u32 %v1571, 7
          %v1573 = vsub.s32 4, %v1572
          %v1574 = vrot.slane %v1262, %v1573
          %v1575 = vlaneseq
          %v1576 = vshrl.u32 %v1575, 7
          %v1577 = vsub.s32 4, %v1576
          %v1578 = vrot.slane %v1263, %v1577
          %v1579 = vmul.f32 %v1569, %v1574
          %v1580 = vmul.f32 %v1569, %v1578
          %v1581 = vadd.f32 %v1565, %v1579
          %v1582 = vadd.f32 %v1566, %v1580
          %v1585 = vrot.slane %v1581, 6
          %v1586 = vrot.slane %v1582, 6
          %v1589 = vmul.f32 %v1569, %v1585
          %v1590 = vmul.f32 %v1569, %v1586
          %v1593 = vrot.slane %v1589, 2
          %v1594 = vrot.slane %v1590, 2
          %v1597 = vsel %vm1356, %v1593, 0.0
          %v1598 = vrot.slane %v1597, 4
          %v1599 = vadd.f32 %v1597, %v1598
          %v1600 = vrot.slane %v1599, 2
          %v1601 = vadd.f32 %v1599, %v1600
          %v1602 = vrot.slane %v1601, 1
          %v1603 = vadd.f32 %v1601, %v1602
          %v1604 = vsel %vm1356, %v1594, 0.0
          %v1605 = vrot.slane %v1604, 4
          %v1606 = vadd.f32 %v1604, %v1605
          %v1607 = vrot.slane %v1606, 2
          %v1608 = vadd.f32 %v1606, %v1607
          %v1609 = vrot.slane %v1608, 1
          %v1610 = vadd.f32 %v1608, %v1609
          %v1611 = vlaneseq
          %v1612 = vshrl.u32 %v1611, 7
          %v1613 = vsub.s32 5, %v1612
          %v1614 = vrot.slane %v1258, %v1613
          %v1615 = vlaneseq
          %v1616 = vshrl.u32 %v1615, 7
          %v1617 = vsub.s32 5, %v1616
          %v1618 = vrot.slane %v1259, %v1617
          %v1619 = vmul.f32 %v1614, %v1313
          %v1620 = vmul.f32 %v1618, %v1314
          %v1621 = vmul.f32 %v1619, 1.442695
          %v1622 = vpow.pop %v1621
          %v1623 = vmul.f32 %v1620, 1.442695
          %v1624 = vpow.pop %v1623
          %v1625 = vmul.f32 %v1622, %v1581
          %v1626 = vmul.f32 %v1624, %v1582
          %1627 = vset.pattern.permute.xlu0 5
          %1628 = vperm.xlu0 %1627, %v1282
          %v1629 = vpop.permute.xlu0 %1628
          %v1631 = vlaneseq
          %v1632 = vshrl.u32 %v1631, 7
          %v1633 = vsub.s32 5, %v1632
          %v1634 = vrot.slane %v1262, %v1633
          %v1635 = vlaneseq
          %v1636 = vshrl.u32 %v1635, 7
          %v1637 = vsub.s32 5, %v1636
          %v1638 = vrot.slane %v1263, %v1637
          %v1639 = vmul.f32 %v1629, %v1634
          %v1640 = vmul.f32 %v1629, %v1638
          %v1641 = vadd.f32 %v1625, %v1639
          %v1642 = vadd.f32 %v1626, %v1640
          %v1645 = vrot.slane %v1641, 6
          %v1646 = vrot.slane %v1642, 6
          %v1649 = vmul.f32 %v1629, %v1645
          %v1650 = vmul.f32 %v1629, %v1646
          %v1653 = vrot.slane %v1649, 2
          %v1654 = vrot.slane %v1650, 2
          %v1657 = vsel %vm1356, %v1653, 0.0
          %v1658 = vrot.slane %v1657, 4
          %v1659 = vadd.f32 %v1657, %v1658
          %v1660 = vrot.slane %v1659, 2
          %v1661 = vadd.f32 %v1659, %v1660
          %v1662 = vrot.slane %v1661, 1
          %v1663 = vadd.f32 %v1661, %v1662
          %v1664 = vsel %vm1356, %v1654, 0.0
          %v1665 = vrot.slane %v1664, 4
          %v1666 = vadd.f32 %v1664, %v1665
          %v1667 = vrot.slane %v1666, 2
          %v1668 = vadd.f32 %v1666, %v1667
          %v1669 = vrot.slane %v1668, 1
          %v1670 = vadd.f32 %v1668, %v1669
          %v1671 = vlaneseq
          %v1672 = vshrl.u32 %v1671, 7
          %v1673 = vsub.s32 6, %v1672
          %v1674 = vrot.slane %v1258, %v1673
          %v1675 = vlaneseq
          %v1676 = vshrl.u32 %v1675, 7
          %v1677 = vsub.s32 6, %v1676
          %v1678 = vrot.slane %v1259, %v1677
          %v1679 = vmul.f32 %v1674, %v1313
          %v1680 = vmul.f32 %v1678, %v1314
          %v1681 = vmul.f32 %v1679, 1.442695
          %v1682 = vpow.pop %v1681
          %v1683 = vmul.f32 %v1680, 1.442695
          %v1684 = vpow.pop %v1683
          %v1685 = vmul.f32 %v1682, %v1641
          %v1686 = vmul.f32 %v1684, %v1642
          %1687 = vset.pattern.permute.xlu0 6
          %1688 = vperm.xlu0 %1687, %v1282
          %v1689 = vpop.permute.xlu0 %1688
          %v1691 = vlaneseq
          %v1692 = vshrl.u32 %v1691, 7
          %v1693 = vsub.s32 6, %v1692
          %v1694 = vrot.slane %v1262, %v1693
          %v1695 = vlaneseq
          %v1696 = vshrl.u32 %v1695, 7
          %v1697 = vsub.s32 6, %v1696
          %v1698 = vrot.slane %v1263, %v1697
          %v1699 = vmul.f32 %v1689, %v1694
          %v1700 = vmul.f32 %v1689, %v1698
          %v1701 = vadd.f32 %v1685, %v1699
          %v1702 = vadd.f32 %v1686, %v1700
          %v1705 = vrot.slane %v1701, 6
          %v1706 = vrot.slane %v1702, 6
          %v1709 = vmul.f32 %v1689, %v1705
          %v1710 = vmul.f32 %v1689, %v1706
          %v1713 = vrot.slane %v1709, 2
          %v1714 = vrot.slane %v1710, 2
          %v1717 = vsel %vm1356, %v1713, 0.0
          %v1718 = vrot.slane %v1717, 4
          %v1719 = vadd.f32 %v1717, %v1718
          %v1720 = vrot.slane %v1719, 2
          %v1721 = vadd.f32 %v1719, %v1720
          %v1722 = vrot.slane %v1721, 1
          %v1723 = vadd.f32 %v1721, %v1722
          %v1724 = vsel %vm1356, %v1714, 0.0
          %v1725 = vrot.slane %v1724, 4
          %v1726 = vadd.f32 %v1724, %v1725
          %v1727 = vrot.slane %v1726, 2
          %v1728 = vadd.f32 %v1726, %v1727
          %v1729 = vrot.slane %v1728, 1
          %v1730 = vadd.f32 %v1728, %v1729
          %v1731 = vlaneseq
          %v1732 = vshrl.u32 %v1731, 7
          %v1733 = vsub.s32 7, %v1732
          %v1734 = vrot.slane %v1258, %v1733
          %v1735 = vlaneseq
          %v1736 = vshrl.u32 %v1735, 7
          %v1737 = vsub.s32 7, %v1736
          %v1738 = vrot.slane %v1259, %v1737
          %v1739 = vmul.f32 %v1734, %v1313
          %v1740 = vmul.f32 %v1738, %v1314
          %v1741 = vmul.f32 %v1739, 1.442695
          %v1742 = vpow.pop %v1741
          %v1743 = vmul.f32 %v1740, 1.442695
          %v1744 = vpow.pop %v1743
          %v1745 = vmul.f32 %v1742, %v1701
          %v1746 = vmul.f32 %v1744, %v1702
          %1747 = vset.pattern.permute.xlu0 7
          %1748 = vperm.xlu0 %1747, %v1282
          %v1749 = vpop.permute.xlu0 %1748
          %v1751 = vlaneseq
          %v1752 = vshrl.u32 %v1751, 7
          %v1753 = vsub.s32 7, %v1752
          %v1754 = vrot.slane %v1262, %v1753
          %v1755 = vlaneseq
          %v1756 = vshrl.u32 %v1755, 7
          %v1757 = vsub.s32 7, %v1756
          %v1758 = vrot.slane %v1263, %v1757
          %v1759 = vmul.f32 %v1749, %v1754
          %v1760 = vmul.f32 %v1749, %v1758
          %v1761 = vadd.f32 %v1745, %v1759
          %v1762 = vadd.f32 %v1746, %v1760
          %v1765 = vrot.slane %v1761, 6
          %v1766 = vrot.slane %v1762, 6
          %v1769 = vmul.f32 %v1749, %v1765
          %v1770 = vmul.f32 %v1749, %v1766
          %v1773 = vrot.slane %v1769, 2
          %v1774 = vrot.slane %v1770, 2
          %v1777 = vsel %vm1356, %v1773, 0.0
          %v1778 = vrot.slane %v1777, 4
          %v1779 = vadd.f32 %v1777, %v1778
          %v1780 = vrot.slane %v1779, 2
          %v1781 = vadd.f32 %v1779, %v1780
          %v1782 = vrot.slane %v1781, 1
          %v1783 = vadd.f32 %v1781, %v1782
          %v1784 = vsel %vm1356, %v1774, 0.0
          %v1785 = vrot.slane %v1784, 4
          %v1786 = vadd.f32 %v1784, %v1785
          %v1787 = vrot.slane %v1786, 2
          %v1788 = vadd.f32 %v1786, %v1787
          %v1789 = vrot.slane %v1788, 1
          %v1790 = vadd.f32 %v1788, %v1789
          %v1791 = vsel %vm788, %v1363, %v1423
          %v1792 = vsel %vm788, %v1370, %v1430
          %v1793 = vsel %vm1356, %v1791, %v1483
          %v1794 = vsel %vm1356, %v1792, %v1490
          %vm1795 = vcmask 1042432
          %v1796 = vsel %vm1795, %v1793, %v1543
          %v1797 = vsel %vm1795, %v1794, %v1550
          %v1798 = vsel %vm1130, %v1796, %v1603
          %v1799 = vsel %vm1130, %v1797, %v1610
          %vm1800 = vcmask 1044480
          %v1801 = vsel %vm1800, %v1798, %v1663
          %v1802 = vsel %vm1800, %v1799, %v1670
          %vm1803 = vcmask 1045504
          %v1804 = vsel %vm1803, %v1801, %v1723
          %v1805 = vsel %vm1803, %v1802, %v1730
          %vm1806 = vcmask 1046528
          %v1807 = vsel %vm1806, %v1804, %v1783
          %v1808 = vsel %vm1806, %v1805, %v1790
          %s1809 = smul.addr %s1255, 8
          %s1810 = scalar_lea.vmem [#allocation7], %s1809
          %1811 = vst [vmem:[%s1810] sm:$0xff] %v1807
          %1812 = vst [vmem:[%s1810 + $0x8] sm:$0xff] %v1808
        $region85: #{tpu_custom_call.1} parent=59 // loop_footer
          %s1249 = sadd.s32 1, %s1245
        $region86: #{tpu_custom_call.1} parent=59 // loop_footer_branch
          %1244 = sbr.rel target = $region82
        $region87: #{tpu_custom_call.1} parent=59 // loop_exit
          _
        %v1815 = vcombine.low %v1250, %v1251
        %v1817 = vunpack.c.l.s4 1983009808
        %v1818 = vunpack.c.0.s8 %v1817
        %v1819 = vlaneseq
        %v1820 = vshrl.u32 %v1819, 7
        %v1821 = vsub.s32 %v1818, %v1820
        %v1822 = vrot.slane %v1815, %v1821
        %1824 = vst [vmem:[#allocation3] sm:$0xf] %v1822
        %v1825 = vld [vmem:[#allocation7] sm:$0xff]
        %v1826 = vld [vmem:[#allocation7 + $0x8] sm:$0xff]
        %v1827 = vld [vmem:[#allocation7 + $0x10] sm:$0xff]
        %v1828 = vld [vmem:[#allocation7 + $0x18] sm:$0xff]
        %v1829 = vld [vmem:[%s8] sm:$0x3]
        %v1831 = vlaneseq
        %v1832 = vshrl.u32 %v1831, 7
        %v1833 = vsub.s32 0, %v1832
        %v1834 = vrot.slane %v1829, %v1833
        %v1835 = vlaneseq
        %v1836 = vshrl.u32 %v1835, 7
        %v1837 = vsub.s32 1, %v1836
        %v1838 = vrot.slane %v1829, %v1837
        %v1841 = vmul.f32 %v1834, %v864
        %v1842 = vmul.f32 %v1838, %v865
        %v1843 = vmul.f32 %v1834, %v866
        %v1844 = vmul.f32 %v1838, %v867
        %v1845 = vadd.f32 %v1825, %v1841
        %v1846 = vadd.f32 %v1826, %v1842
        %v1847 = vadd.f32 %v1827, %v1843
        %v1848 = vadd.f32 %v1828, %v1844
        %v1849 = vsub.f32 0.0, %v731
        %v1850 = vsub.f32 0.0, %v733
        %v1851 = vsub.f32 0.0, %v735
        %v1852 = vsub.f32 0.0, %v737
        %v1853 = vmul.f32 %v1849, 1.442695
        %v1854 = vpow.pop %v1853
        %v1855 = vmul.f32 %v1850, 1.442695
        %v1856 = vpow.pop %v1855
        %v1857 = vmul.f32 %v1851, 1.442695
        %v1858 = vpow.pop %v1857
        %v1859 = vmul.f32 %v1852, 1.442695
        %v1860 = vpow.pop %v1859
        %v1861 = vadd.f32 %v1854, 1.0
        %v1862 = vadd.f32 %v1856, 1.0
        %v1863 = vadd.f32 %v1858, 1.0
        %v1864 = vadd.f32 %v1860, 1.0
        %v1865 = vrcp.pop %v1861
        %v1866 = vrcp.pop %v1862
        %v1867 = vrcp.pop %v1863
        %v1868 = vrcp.pop %v1864
        %v1869 = vmul.f32 %v731, %v1865
        %v1870 = vmul.f32 %v733, %v1866
        %v1871 = vmul.f32 %v735, %v1867
        %v1872 = vmul.f32 %v737, %v1868
        %v1873 = vmul.f32 %v1845, %v1869
        %v1874 = vmul.f32 %v1846, %v1870
        %v1875 = vmul.f32 %v1847, %v1871
        %v1876 = vmul.f32 %v1848, %v1872
        %v1877 = vpack.c.bf16 %v1875, %v1873
        %v1878 = vpack.c.bf16 %v1876, %v1874
        %v1879 = vld [vmem:[#allocation14] sm:$0xf]
        %v1880 = vld [vmem:[#allocation14 + $0x4] sm:$0xf]
        %v1881 = vld [vmem:[#allocation14 + $0x8] sm:$0xf]
        %v1882 = vld [vmem:[#allocation14 + $0xc] sm:$0xf]
        %v1883 = vld [vmem:[#allocation14 + $0x10] sm:$0xf]
        %v1884 = vld [vmem:[#allocation14 + $0x14] sm:$0xf]
        %v1885 = vld [vmem:[#allocation14 + $0x18] sm:$0xf]
        %v1886 = vld [vmem:[#allocation14 + $0x1c] sm:$0xf]
        %v1887 = vld [vmem:[#allocation14 + $0x20] sm:$0xf]
        %v1888 = vld [vmem:[#allocation14 + $0x24] sm:$0xf]
        %v1889 = vld [vmem:[#allocation14 + $0x28] sm:$0xf]
        %v1890 = vld [vmem:[#allocation14 + $0x2c] sm:$0xf]
        %v1891 = vld [vmem:[#allocation14 + $0x30] sm:$0xf]
        %v1892 = vld [vmem:[#allocation14 + $0x34] sm:$0xf]
        %v1893 = vld [vmem:[#allocation14 + $0x38] sm:$0xf]
        %v1894 = vld [vmem:[#allocation14 + $0x3c] sm:$0xf]
        %v1895 = vld [vmem:[#allocation14 + $0x40] sm:$0xf]
        %v1896 = vld [vmem:[#allocation14 + $0x44] sm:$0xf]
        %v1897 = vld [vmem:[#allocation14 + $0x48] sm:$0xf]
        %v1898 = vld [vmem:[#allocation14 + $0x4c] sm:$0xf]
        %v1899 = vld [vmem:[#allocation14 + $0x50] sm:$0xf]
        %v1900 = vld [vmem:[#allocation14 + $0x54] sm:$0xf]
        %v1901 = vld [vmem:[#allocation14 + $0x58] sm:$0xf]
        %v1902 = vld [vmem:[#allocation14 + $0x5c] sm:$0xf]
        %v1903 = vld [vmem:[#allocation14 + $0x60] sm:$0xf]
        %v1904 = vld [vmem:[#allocation14 + $0x64] sm:$0xf]
        %v1905 = vld [vmem:[#allocation14 + $0x68] sm:$0xf]
        %v1906 = vld [vmem:[#allocation14 + $0x6c] sm:$0xf]
        %v1907 = vld [vmem:[#allocation14 + $0x70] sm:$0xf]
        %v1908 = vld [vmem:[#allocation14 + $0x74] sm:$0xf]
        %v1909 = vld [vmem:[#allocation14 + $0x78] sm:$0xf]
        %v1910 = vld [vmem:[#allocation14 + $0x7c] sm:$0xf]
        %v1943 = vunpack.c.l.b16 %v1879
        %v1944 = vunpack.c.l.b16 %v1880
        %v1945 = vunpack.c.l.b16 %v1881
        %v1946 = vunpack.c.l.b16 %v1882
        %v1947 = vunpack.c.l.b16 %v1883
        %v1948 = vunpack.c.l.b16 %v1884
        %v1949 = vunpack.c.l.b16 %v1885
        %v1950 = vunpack.c.l.b16 %v1886
        %v1951 = vunpack.c.l.b16 %v1887
        %v1952 = vunpack.c.l.b16 %v1888
        %v1953 = vunpack.c.l.b16 %v1889
        %v1954 = vunpack.c.l.b16 %v1890
        %v1955 = vunpack.c.l.b16 %v1891
        %v1956 = vunpack.c.l.b16 %v1892
        %v1957 = vunpack.c.l.b16 %v1893
        %v1958 = vunpack.c.l.b16 %v1894
        %v1959 = vunpack.c.l.b16 %v1895
        %v1960 = vunpack.c.l.b16 %v1896
        %v1961 = vunpack.c.l.b16 %v1897
        %v1962 = vunpack.c.l.b16 %v1898
        %v1963 = vunpack.c.l.b16 %v1899
        %v1964 = vunpack.c.l.b16 %v1900
        %v1965 = vunpack.c.l.b16 %v1901
        %v1966 = vunpack.c.l.b16 %v1902
        %v1967 = vunpack.c.l.b16 %v1903
        %v1968 = vunpack.c.l.b16 %v1904
        %v1969 = vunpack.c.l.b16 %v1905
        %v1970 = vunpack.c.l.b16 %v1906
        %v1971 = vunpack.c.l.b16 %v1907
        %v1972 = vunpack.c.l.b16 %v1908
        %v1973 = vunpack.c.l.b16 %v1909
        %v1974 = vunpack.c.l.b16 %v1910
        %v1975 = vpack.c.b16 %v1944, %v1943
        %v1976 = vpack.c.b16 %v1946, %v1945
        %v1977 = vpack.c.b16 %v1948, %v1947
        %v1978 = vpack.c.b16 %v1950, %v1949
        %v1979 = vpack.c.b16 %v1952, %v1951
        %v1980 = vpack.c.b16 %v1954, %v1953
        %v1981 = vpack.c.b16 %v1956, %v1955
        %v1982 = vpack.c.b16 %v1958, %v1957
        %v1983 = vpack.c.b16 %v1960, %v1959
        %v1984 = vpack.c.b16 %v1962, %v1961
        %v1985 = vpack.c.b16 %v1964, %v1963
        %v1986 = vpack.c.b16 %v1966, %v1965
        %v1987 = vpack.c.b16 %v1968, %v1967
        %v1988 = vpack.c.b16 %v1970, %v1969
        %v1989 = vpack.c.b16 %v1972, %v1971
        %v1990 = vpack.c.b16 %v1974, %v1973
        %2007 = vmatprep.subr.bf16.mxu0 0
        %2008 = vmatpush1.bf16.msra.mxu0 %v1975
        %2009 = vmatprep.subr.bf16.mxu0 0
        %2010 = vmatpush1.bf16.msra.mxu0 %v1976
        %2011 = vmatprep.subr.bf16.mxu0 0
        %2012 = vmatpush1.bf16.msra.mxu0 %v1977
        %2013 = vmatprep.subr.bf16.mxu0 0
        %2014 = vmatpush1.bf16.msra.mxu0 %v1978
        %2015 = vmatprep.subr.bf16.mxu0 0
        %2016 = vmatpush1.bf16.msra.mxu0 %v1979
        %2017 = vmatprep.subr.bf16.mxu0 0
        %2018 = vmatpush1.bf16.msra.mxu0 %v1980
        %2019 = vmatprep.subr.bf16.mxu0 0
        %2020 = vmatpush1.bf16.msra.mxu0 %v1981
        %2021 = vmatprep.subr.bf16.mxu0 0
        %2022 = vmatpush1.bf16.msra.mxu0 %v1982
        %2023 = vmatprep.subr.bf16.mxu0 0
        %2024 = vmatpush1.bf16.msra.mxu0 %v1983
        %2025 = vmatprep.subr.bf16.mxu0 0
        %2026 = vmatpush1.bf16.msra.mxu0 %v1984
        %2027 = vmatprep.subr.bf16.mxu0 0
        %2028 = vmatpush1.bf16.msra.mxu0 %v1985
        %2029 = vmatprep.subr.bf16.mxu0 0
        %2030 = vmatpush1.bf16.msra.mxu0 %v1986
        %2031 = vmatprep.subr.bf16.mxu0 0
        %2032 = vmatpush1.bf16.msra.mxu0 %v1987
        %2033 = vmatprep.subr.bf16.mxu0 0
        %2034 = vmatpush1.bf16.msra.mxu0 %v1988
        %2035 = vmatprep.subr.bf16.mxu0 0
        %2036 = vmatpush1.bf16.msra.mxu0 %v1989
        %2037 = vmatprep.subr.bf16.mxu0 0
        %2038 = vmatpush1.bf16.msra.mxu0 %v1990
        %2039 = vmatprep.mubr.bf16.mxu0 %v1878
        %2040 = vmatmul.mubr.bf16.gmra.mrb[0].mxu0 %v1877
        %v2041 = vpop.f32.mrb[0].mxu0
        %v2042 = vadd.f32 0.0, %v2041
        %v2043 = vpop.f32.mrb[0].mxu0
        %v2044 = vpop.f32.mrb[0].mxu0
        %v2045 = vadd.f32 0.0, %v2044
        %v2046 = vpop.f32.mrb[0].mxu0
        %2047 = vdwg.mxu0
        %2048 = vst [vmem:[%s439] sm:$0xff] %v2042
        %2049 = vst [vmem:[%s439 + $0x8] sm:$0xff] %v2045
        %s2050 = sand.u32 %s268, 1
        %s2051 = scalar_lea.sflag [#allocation10], %s2050
        %s2052 = sand.u32 %s268, 1
        %s2053 = smul.addr %s2052, 16
        %s2054 = scalar_lea.vmem [#allocation16], %s2053
        // Predicated region
        $region88: #{tpu_custom_call.1} parent=59 // pred_check
          %p2055 = pneg %p278
        $region89: #{tpu_custom_call.1} parent=59 // pred_check_branch
          %2057 = sbr.rel (%p2055) target = $region91
        $region90: #{tpu_custom_call.1} parent=59 // pred_region
          %s2058 = smul.u32 2, %s34
          %s2060 = ssub.s32 256, 256
          %2061 = vsyncadd %s2051, %s2060
          %s2062 = smul.addr %s33, 4
          %s2063 = sadd.s32 %s2058, %s2062
          %s2064 = smul.addr %s2063, 128
          %s2065 = scalar_lea.hbm %s10, %s2064
          %s2066 = sshll.u32 %s2054, 4
          %s2067 = int_to_ptr.vmem [resolvable:$true] %s2066
          %2072 = dma.vmem_to_hbm [thread:$0]  %s2067, 256, %s2065, %s2051, 128, 128, 8
        $region91: #{tpu_custom_call.1} parent=59 // pred_fallthru
          _
      $region60: #{tpu_custom_call.1} parent=5 // pred_fallthru
        _
      %p2073 = scmp.le.s32.totalorder 2, %s24
      // Predicated region
      $region92: #{tpu_custom_call.1} parent=5 // pred_check
        %p2074 = pneg %p2073
      $region93: #{tpu_custom_call.1} parent=5 // pred_check_branch
        %2076 = sbr.rel (%p2074) target = $region95
      $region94: #{tpu_custom_call.1} parent=5 // pred_region
        %s2077 = ssub.s32 %s24, 2
        // Predicated region
        $region96: #{tpu_custom_call.1} parent=94 // pred_check
          %p2078 = pneg %p284
        $region97: #{tpu_custom_call.1} parent=94 // pred_check_branch
          %2080 = sbr.rel (%p2078) target = $region99
        $region98: #{tpu_custom_call.1} parent=94 // pred_region
          %s2081 = sand.u32 %s269, 1
          %s2082 = scalar_lea.sflag [#allocation10], %s2081
          %s2083 = sand.u32 %s269, 1
          %s2084 = smul.addr %s2083, 16
          %s2085 = scalar_lea.vmem [#allocation16], %s2084
          %2086 = dma.done %s2082, 256
        $region99: #{tpu_custom_call.1} parent=94 // pred_fallthru
          _
      $region95: #{tpu_custom_call.1} parent=5 // pred_fallthru
        _
    $region6: #{tpu_custom_call.1} parent=1 // loop_footer
      %s28 = sadd.s32 1, %s24
    $region7: #{tpu_custom_call.1} parent=1 // loop_footer_branch
      %23 = sbr.rel target = $region3
    $region8: #{tpu_custom_call.1} parent=1 // loop_exit
      _
    %2087 = vsyncpa [#allocation9], 1
    %s2088 = scalar_lea.sflag [#allocation9], 1
    %2089 = vsyncpa %s2088, 1
    %2090 = vsyncpa [#allocation12], 1
    %2091 = vsyncpa [#allocation15], 1
    %2092 = vsyncpa [#allocation10], 1
    %s2093 = scalar_lea.sflag [#allocation10], 1
    %2094 = vsyncpa %s2093, 1

</llo_original>
